<compile_context>
chip_gen: v7x
topology: tpu7x:2x2x1
jax: 0.10.0
libtpu: 0.0.40
codegen_flags: <defaults>
</compile_context>

<pallas_src>
import functools

import jax
import jax.numpy as jnp
import numpy as np
from jax import lax
from jax.experimental import pallas as pl
from jax.experimental.pallas import tpu as pltpu

# Split the batch across grid steps (and TensorCores on v7x via "parallel").
# Keep 1 on single-TensorCore parts (v5e/v6e): the time loop is latency-bound,
# so serialising batch blocks there would only add overhead.
NUM_BATCH_BLOCKS = 1


def _decoder_kernel(
    # ---- inputs (resident in VMEM) ----
    x_ref,          # (B, H)   decoder_input (constant across steps)
    h0_ref,         # (B, H)   initial hidden
    ctx_ref,        # (B, L, H) context, storage dtype (f32 or bf16)
    wih_ref, bih_ref,        # (H, 3H), (1, 3H)
    whhq_ref, bhhq_ref,      # (H, 4H) = [whh.T | e_wq.T], (1, 4H)
    wref_ref, bref_ref,      # (H, 2H) = [e_wr.T | s_wr.T] (storage dtype), (1, 2H)
    ve_ref, vs_ref,          # (1, H), (1, H)
    wqs_ref, bqs_ref,        # (H, H), (1, H)
    wenc_ref, benc_ref,      # (2H, H), (1, H)   Conv1d(k=2) fused
    wcls_ref, bcls_ref,      # (3H, C), (1, C)   Conv1d(k=3) fused
    # ---- outputs (resident, written once per step / at end) ----
    logits_s_ref,   # (T, B, L)
    logits_e_ref,   # (T, B, L)
    cls_ref,        # (T, B, C)
    hidden_out_ref, # (B, H)
):
    f32 = jnp.float32
    T = logits_s_ref.shape[0]
    ctx = ctx_ref[...]                                  # (B, L, H), loaded once
    B, L, H = ctx.shape
    H3 = 3 * H
    ctx2d = ctx.reshape(B * L, H)

    # ================= loop-invariant prologue =================
    # GRU input-side gates: decoder_input is fixed for every step (exact hoist).
    gates1 = (jnp.dot(x_ref[...].astype(f32), wih_ref[...],
                      preferred_element_type=f32) + bih_ref[...])       # (B, 3H)
    i_r, i_z, i_n = gates1[:, :H], gates1[:, H:2 * H], gates1[:, 2 * H:]

    # Both pointer-head reference projections in ONE matmul (fused wre|wrs).
    proj = (jnp.dot(ctx2d, wref_ref[...], preferred_element_type=f32)
            + bref_ref[...]).astype(ctx.dtype)                          # (B*L, 2H)
    e_proj = proj[:, :H].reshape(B, L, H)
    s_proj = proj[:, H:].reshape(B, L, H)

    # Loop-invariant weights / pre-broadcast biases (hoisted: no per-iter bcast).
    whhq = whhq_ref[...]
    bhhq_b = jnp.broadcast_to(bhhq_ref[...], (B, 4 * H))
    wqs = wqs_ref[...]
    bqs_b = jnp.broadcast_to(bqs_ref[...], (B, H))
    v_e = ve_ref[...].reshape(1, 1, H)
    v_s = vs_ref[...].reshape(1, 1, H)
    wenc = wenc_ref[...]
    benc_b = jnp.broadcast_to(benc_ref[...], (B, H))
    wcls = wcls_ref[...]
    C = wcls.shape[1]
    bcls_b = jnp.broadcast_to(bcls_ref[...], (B, C))

    iota_l = lax.broadcasted_iota(jnp.int32, (B, L), 1)                 # (B, L)

    # ================= per-step helpers =================
    def attention(q, proj_, v):
        # q: (B, H) already projected+biased; proj_: (B, L, H) hoisted projection.
        return jnp.sum(jnp.tanh(q[:, None, :] + proj_.astype(f32)) * v, axis=-1)

    def argmax_gather(logits):
        # first occurrence of the max (matches torch.max / jnp.argmax semantics)
        maxv = jnp.max(logits, axis=1, keepdims=True)
        idx = jnp.min(jnp.where(logits == maxv, iota_l, L), axis=1,
                      keepdims=True)                                    # (B, 1)
        # per-batch one-hot gather: O(B*L*H) VPU work, no quadratic temporaries
        oh = (iota_l == idx).astype(f32)                                # (B, L)
        return jnp.sum(ctx.astype(f32) * oh[:, :, None], axis=1)        # (B, H)

    # Prime the hidden-side GRU gates for step 0 (whh part of the fused weight).
    h0 = h0_ref[...].astype(f32)
    prime = jnp.dot(h0, whhq, preferred_element_type=f32) + bhhq_b
    h_gates0 = prime[:, :H3]

    # ================= time loop (value-carried, unrolled) =================
    def step(t, carry):
        hx, h_gates = carry                                             # (B,H),(B,3H)

        # GRU cell (hidden-side matmul was done at the end of the previous step)
        r_t = jax.nn.sigmoid(i_r + h_gates[:, :H])
        z_t = jax.nn.sigmoid(i_z + h_gates[:, H:2 * H])
        n_t = jnp.tanh(i_n + r_t * h_gates[:, 2 * H:])
        hy = (1.0 - z_t) * n_t + z_t * hx                               # g_l

        # fused hy @ [whh | wqe]: next-step GRU gates + e-attention query
        fused = jnp.dot(hy, whhq, preferred_element_type=f32) + bhhq_b  # (B, 4H)
        h_gates_next = fused[:, :H3]
        q_e = fused[:, H3:]

        # tail pointer + gather
        logits_e = attention(q_e, e_proj, v_e)
        g_l_e = argmax_gather(logits_e)

        # encoding_s == Conv1d(H, H, k=2) on stack([g_l_e, g_l], -1), fused matmul
        s_enc = (jnp.dot(jnp.concatenate([g_l_e, hy], axis=-1), wenc,
                         preferred_element_type=f32) + benc_b)

        # head pointer + gather
        q_s = jnp.dot(s_enc, wqs, preferred_element_type=f32) + bqs_b
        logits_s = attention(q_s, s_proj, v_s)
        g_l_s = argmax_gather(logits_s)

        # cls == Conv1d(H, C, k=3) on stack([g_l_s, g_l_e, g_l], -1), fused matmul
        cls_score = (jnp.dot(jnp.concatenate([g_l_s, g_l_e, hy], axis=-1),
                             wcls, preferred_element_type=f32) + bcls_b)

        # writebacks for this step (indices recomputed outside from the logits)
        logits_s_ref[t] = logits_s
        logits_e_ref[t] = logits_e
        cls_ref[t] = cls_score
        return hy, h_gates_next

    unroll = True if T <= 8 else 4
    h_final, _ = lax.fori_loop(0, T, step, (h0, h_gates0), unroll=unroll)

    hidden_out_ref[...] = h_final


@functools.partial(jax.jit, static_argnames=("max_len",))
def decoder_forward(params, decoder_input, hidden, context, max_len):
    """context: [sourceL, B, H] exactly as the PyTorch module expects."""
    L, B, H = context.shape
    C = params["cls_w"].shape[0]
    T = int(max_len)
    f32 = jnp.float32

    # Storage dtype for ctx / fused reference weight / context projections.
    # f32 at small shapes (bit-faithful); bf16 when the f32 footprint would
    # pressure VMEM (critical on v7x's 64 MiB). Accumulation stays f32 and all
    # elementwise math stays f32 (v5e has no bf16 VPU/EUP path).
    ctx_f32_bytes = 3 * B * L * H * 4            # ctx + e_proj + s_proj in f32
    storage = jnp.bfloat16 if ctx_f32_bytes > (24 << 20) else f32

    ctx = jnp.transpose(context, (1, 0, 2)).astype(storage)     # (B, L, H)

    # Fused weight matrices.
    w_hh_qe = jnp.concatenate([params["whh"].T, params["e_wq"].T], axis=1)     # (H, 4H)
    b_hh_qe = jnp.concatenate([params["bhh"], params["e_bq"]]).reshape(1, -1)  # (1, 4H)
    w_ref_cat = jnp.concatenate([params["e_wr"][:, :, 0].T,
                                 params["s_wr"][:, :, 0].T], axis=1)           # (H, 2H)
    b_ref_cat = jnp.concatenate([params["e_br"], params["s_br"]]).reshape(1, -1)
    w_enc_cat = jnp.concatenate([params["enc_w"][:, :, 0].T,
                                 params["enc_w"][:, :, 1].T], axis=0)          # (2H, H)
    w_cls_cat = jnp.concatenate([params["cls_w"][:, :, 0].T,
                                 params["cls_w"][:, :, 1].T,
                                 params["cls_w"][:, :, 2].T], axis=0)          # (3H, C)

    ins = [
        decoder_input.astype(f32),                   # x    (B, H)
        hidden.astype(f32),                          # h0   (B, H)
        ctx,                                         # ctx  (B, L, H) storage dtype
        params["wih"].T.astype(f32), params["bih"].reshape(1, -1).astype(f32),
        w_hh_qe.astype(f32), b_hh_qe.astype(f32),
        w_ref_cat.astype(storage), b_ref_cat.astype(f32),
        params["e_v"].reshape(1, -1).astype(f32),
        params["s_v"].reshape(1, -1).astype(f32),
        params["s_wq"].T.astype(f32), params["s_bq"].reshape(1, -1).astype(f32),
        w_enc_cat.astype(f32), params["enc_b"].reshape(1, -1).astype(f32),
        w_cls_cat.astype(f32), params["cls_b"].reshape(1, -1).astype(f32),
    ]

    # Batch-block grid (nb=1 by default; "parallel" lets v7x shard across TCs).
    nb = NUM_BATCH_BLOCKS
    assert B % nb == 0, "batch must divide NUM_BATCH_BLOCKS"
    bs = B // nb

    def wspec(shape):
        nd = len(shape)
        return pl.BlockSpec(tuple(shape), lambda i, _nd=nd: (0,) * _nd)

    in_specs = [
        pl.BlockSpec((bs, H), lambda i: (i, 0)),          # x
        pl.BlockSpec((bs, H), lambda i: (i, 0)),          # h0
        pl.BlockSpec((bs, L, H), lambda i: (i, 0, 0)),    # ctx
    ] + [wspec(a.shape) for a in ins[3:]]

    out_shape = (
        jax.ShapeDtypeStruct((T, B, L), f32),        # logits_s (outputs_head)
        jax.ShapeDtypeStruct((T, B, L), f32),        # logits_e (outputs_tail)
        jax.ShapeDtypeStruct((T, B, C), f32),        # cls_scores
        jax.ShapeDtypeStruct((B, H), f32),           # final hidden
    )
    out_specs = (
        pl.BlockSpec((T, bs, L), lambda i: (0, i, 0)),
        pl.BlockSpec((T, bs, L), lambda i: (0, i, 0)),
        pl.BlockSpec((T, bs, C), lambda i: (0, i, 0)),
        pl.BlockSpec((bs, H), lambda i: (i, 0)),
    )

    # Explicit VMEM budget from the actual resident set (inputs + outputs +
    # hoisted projections), with 2x headroom for pipeline buffering.
    in_bytes = sum(int(np.prod(a.shape)) * jnp.dtype(a.dtype).itemsize for a in ins)
    out_bytes = (2 * T * B * L + T * B * C + B * H) * 4
    proj_bytes = 2 * B * L * H * jnp.dtype(storage).itemsize
    vmem_limit = int(min(96 << 20,
                         max(32 << 20,
                             2 * (in_bytes + out_bytes + proj_bytes) + (8 << 20))))

    outs = pl.pallas_call(
        _decoder_kernel,
        out_shape=out_shape,
        grid_spec=pltpu.PrefetchScalarGridSpec(
            num_scalar_prefetch=0,
            grid=(nb,),
            in_specs=in_specs,
            out_specs=out_specs,
        ),
        compiler_params=pltpu.CompilerParams(
            dimension_semantics=("parallel",),
            vmem_limit_bytes=vmem_limit),
    )(*ins)

    logits_s, logits_e, cls_scores, hidden_out = outs
    # Argmax recomputed from the kernel's own logits: identical values, same
    # first-occurrence tie-breaking as the in-kernel gather (lane-dense kernel
    # outputs, no (T,B,1) masked stores per step).
    idxs_s = jnp.argmax(logits_s, axis=-1).astype(jnp.int32)
    idxs_e = jnp.argmax(logits_e, axis=-1).astype(jnp.int32)
    return logits_s, idxs_s, logits_e, idxs_e, cls_scores, hidden_out


# ----------------------- pure-JAX reference (for checking) -----------------------
def decoder_forward_ref(params, decoder_input, hidden, context, max_len):
    L, B, H = context.shape
    ctx = jnp.transpose(context, (1, 0, 2)).astype(jnp.float32)   # (B, L, H)

    def attention(query, wq, bq, wr, br, v):
        q = query @ wq.T + bq
        e = jnp.einsum('blh,oh->blo', ctx, wr[:, :, 0]) + br
        return jnp.sum(jnp.tanh(q[:, None, :] + e) * v, axis=-1)

    def gather(logits):
        idx = jnp.argmax(logits, axis=1)
        return ctx[jnp.arange(B), idx], idx

    x, h = decoder_input, hidden
    Ls, Is, Le, Ie, Cs = [], [], [], [], []
    for _ in range(max_len):
        g1 = x @ params["wih"].T + params["bih"]
        g2 = h @ params["whh"].T + params["bhh"]
        i_r, i_z, i_n = jnp.split(g1, 3, axis=1)
        h_r, h_z, h_n = jnp.split(g2, 3, axis=1)
        r = jax.nn.sigmoid(i_r + h_r)
        z = jax.nn.sigmoid(i_z + h_z)
        n = jnp.tanh(i_n + r * h_n)
        hy = (1.0 - z) * n + z * h
        g_l = hy
        logits_e = attention(g_l, params["e_wq"], params["e_bq"],
                             params["e_wr"], params["e_br"], params["e_v"])
        g_l_e, idx_e = gather(logits_e)
        s_enc = (g_l_e @ params["enc_w"][:, :, 0].T
                 + g_l @ params["enc_w"][:, :, 1].T + params["enc_b"])
        logits_s = attention(s_enc, params["s_wq"], params["s_bq"],
                             params["s_wr"], params["s_br"], params["s_v"])
        g_l_s, idx_s = gather(logits_s)
        cls = (g_l_s @ params["cls_w"][:, :, 0].T
               + g_l_e @ params["cls_w"][:, :, 1].T
               + g_l @ params["cls_w"][:, :, 2].T + params["cls_b"])
        h = hy
        Ls.append(logits_s); Is.append(idx_s)
        Le.append(logits_e); Ie.append(idx_e); Cs.append(cls)
    return (jnp.stack(Ls), jnp.stack(Is).astype(jnp.int32),
            jnp.stack(Le), jnp.stack(Ie).astype(jnp.int32),
            jnp.stack(Cs), h)


def make_params(key, H, C):
    ks = jax.random.split(key, 24)
    s = 1.0 / np.sqrt(H)

    def u(k, shape):
        return jax.random.uniform(k, shape, jnp.float32, minval=-s, maxval=s)

    return dict(
        wih=u(ks[0], (3 * H, H)), bih=u(ks[1], (3 * H,)),
        whh=u(ks[2], (3 * H, H)), bhh=u(ks[3], (3 * H,)),
        e_wq=u(ks[4], (H, H)), e_bq=u(ks[5], (H,)),
        e_wr=u(ks[6], (H, H, 1)), e_br=u(ks[7], (H,)), e_v=u(ks[8], (H,)),
        s_wq=u(ks[9], (H, H)), s_bq=u(ks[10], (H,)),
        s_wr=u(ks[11], (H, H, 1)), s_br=u(ks[12], (H,)), s_v=u(ks[13], (H,)),
        enc_w=u(ks[14], (H, H, 2)), enc_b=u(ks[15], (H,)),
        cls_w=u(ks[16], (C, H, 3)), cls_b=u(ks[17], (C,)),
    )


if __name__ == "__main__":
    B, H, L, T, C = 2, 32, 8, 3, 4   # batch, hidden=embedding, sourceL, max_length, classes
    key = jax.random.PRNGKey(0)
    k_in, k_h, k_ctx, k_p = jax.random.split(key, 4)
    decoder_input = jax.random.normal(k_in, (B, H), dtype=jnp.float32)
    hidden = jax.random.normal(k_h, (B, H), dtype=jnp.float32)
    context = jax.random.normal(k_ctx, (L, B, H), dtype=jnp.float32)
    params = make_params(k_p, H, C)

    outs = decoder_forward(params, decoder_input, hidden, context, T)
    outs = jax.block_until_ready(outs)

    ref = decoder_forward_ref(params, decoder_input, hidden, context, T)
    logits_s, idxs_s, logits_e, idxs_e, cls_scores, hidden_out = outs
    r_ls, r_is, r_le, r_ie, r_cls, r_h = ref

    np.testing.assert_allclose(np.asarray(logits_e), np.asarray(r_le), rtol=5e-3, atol=5e-3)
    np.testing.assert_allclose(np.asarray(logits_s), np.asarray(r_ls), rtol=5e-3, atol=5e-3)
    np.testing.assert_allclose(np.asarray(cls_scores), np.asarray(r_cls), rtol=5e-3, atol=5e-3)
    np.testing.assert_allclose(np.asarray(hidden_out), np.asarray(r_h), rtol=5e-3, atol=5e-3)
    np.testing.assert_array_equal(np.asarray(idxs_s), np.asarray(r_is))
    np.testing.assert_array_equal(np.asarray(idxs_e), np.asarray(r_ie))

    print("KERNEL_OK")
</pallas_src>

<mosaic_0001>
module attributes {stable_mosaic.version = 11 : i64} {
  func.func @_decoder_kernel(%arg0: i32, %arg1: memref<2x32xf32, #tpu.memory_space<vmem>>, %arg2: memref<2x32xf32, #tpu.memory_space<vmem>>, %arg3: memref<2x8x32xf32, #tpu.memory_space<vmem>>, %arg4: memref<32x96xf32, #tpu.memory_space<vmem>>, %arg5: memref<1x96xf32, #tpu.memory_space<vmem>>, %arg6: memref<32x128xf32, #tpu.memory_space<vmem>>, %arg7: memref<1x128xf32, #tpu.memory_space<vmem>>, %arg8: memref<32x64xf32, #tpu.memory_space<vmem>>, %arg9: memref<1x64xf32, #tpu.memory_space<vmem>>, %arg10: memref<1x32xf32, #tpu.memory_space<vmem>>, %arg11: memref<1x32xf32, #tpu.memory_space<vmem>>, %arg12: memref<32x32xf32, #tpu.memory_space<vmem>>, %arg13: memref<1x32xf32, #tpu.memory_space<vmem>>, %arg14: memref<64x32xf32, #tpu.memory_space<vmem>>, %arg15: memref<1x32xf32, #tpu.memory_space<vmem>>, %arg16: memref<96x4xf32, #tpu.memory_space<vmem>>, %arg17: memref<1x4xf32, #tpu.memory_space<vmem>>, %arg18: memref<3x2x8xf32, #tpu.memory_space<vmem>>, %arg19: memref<3x2x8xf32, #tpu.memory_space<vmem>>, %arg20: memref<3x2x4xf32, #tpu.memory_space<vmem>>, %arg21: memref<2x32xf32, #tpu.memory_space<vmem>>) attributes {dimension_semantics = [#tpu.dimension_semantics<parallel>], iteration_bounds = array<i64: 1>, scalar_prefetch = 0 : i64, scratch_operands = 0 : i64, tpu.core_type = #tpu.core_type<tc>, window_params = [{transform_indices = @transform_0, window_bounds = array<i64: 2, 32>}, {transform_indices = @transform_1, window_bounds = array<i64: 2, 32>}, {transform_indices = @transform_2, window_bounds = array<i64: 2, 8, 32>}, {pipeline_mode = #tpu.pipeline_mode<synchronous>, transform_indices = @transform_3, window_bounds = array<i64: 32, 96>}, {pipeline_mode = #tpu.pipeline_mode<synchronous>, transform_indices = @transform_4, window_bounds = array<i64: 1, 96>}, {pipeline_mode = #tpu.pipeline_mode<synchronous>, transform_indices = @transform_5, window_bounds = array<i64: 32, 128>}, {pipeline_mode = #tpu.pipeline_mode<synchronous>, transform_indices = @transform_6, window_bounds = array<i64: 1, 128>}, {pipeline_mode = #tpu.pipeline_mode<synchronous>, transform_indices = @transform_7, window_bounds = array<i64: 32, 64>}, {pipeline_mode = #tpu.pipeline_mode<synchronous>, transform_indices = @transform_8, window_bounds = array<i64: 1, 64>}, {pipeline_mode = #tpu.pipeline_mode<synchronous>, transform_indices = @transform_9, window_bounds = array<i64: 1, 32>}, {pipeline_mode = #tpu.pipeline_mode<synchronous>, transform_indices = @transform_10, window_bounds = array<i64: 1, 32>}, {pipeline_mode = #tpu.pipeline_mode<synchronous>, transform_indices = @transform_11, window_bounds = array<i64: 32, 32>}, {pipeline_mode = #tpu.pipeline_mode<synchronous>, transform_indices = @transform_12, window_bounds = array<i64: 1, 32>}, {pipeline_mode = #tpu.pipeline_mode<synchronous>, transform_indices = @transform_13, window_bounds = array<i64: 64, 32>}, {pipeline_mode = #tpu.pipeline_mode<synchronous>, transform_indices = @transform_14, window_bounds = array<i64: 1, 32>}, {pipeline_mode = #tpu.pipeline_mode<synchronous>, transform_indices = @transform_15, window_bounds = array<i64: 96, 4>}, {pipeline_mode = #tpu.pipeline_mode<synchronous>, transform_indices = @transform_16, window_bounds = array<i64: 1, 4>}, {transform_indices = @transform_17, window_bounds = array<i64: 3, 2, 8>}, {transform_indices = @transform_18, window_bounds = array<i64: 3, 2, 8>}, {transform_indices = @transform_19, window_bounds = array<i64: 3, 2, 4>}, {transform_indices = @transform_20, window_bounds = array<i64: 2, 32>}]} {
    %c0 = arith.constant 0 : index
    %c0_0 = arith.constant 0 : index
    %c0_1 = arith.constant 0 : index
    %0 = vector.load %arg3[%c0, %c0_0, %c0_1] : memref<2x8x32xf32, #tpu.memory_space<vmem>>, vector<2x8x32xf32>
    %1 = vector.shape_cast %0 : vector<2x8x32xf32> to vector<16x32xf32>
    %c0_2 = arith.constant 0 : index
    %c0_3 = arith.constant 0 : index
    %2 = vector.load %arg1[%c0_2, %c0_3] : memref<2x32xf32, #tpu.memory_space<vmem>>, vector<2x32xf32>
    %c0_4 = arith.constant 0 : index
    %c0_5 = arith.constant 0 : index
    %3 = vector.load %arg4[%c0_4, %c0_5] : memref<32x96xf32, #tpu.memory_space<vmem>>, vector<32x96xf32>
    %cst = arith.constant dense<0.000000e+00> : vector<2x96xf32>
    %4 = tpu.matmul %2, %3, %cst {dimension_numbers = #tpu.dot_dimension_numbers<[1], [0], [0], [1], [0, 0, 1, 1], [], []>} : vector<2x32xf32>, vector<32x96xf32>, vector<2x96xf32> -> vector<2x96xf32>
    %c0_6 = arith.constant 0 : index
    %c0_7 = arith.constant 0 : index
    %5 = vector.load %arg5[%c0_6, %c0_7] : memref<1x96xf32, #tpu.memory_space<vmem>>, vector<1x96xf32>
    %6 = vector.broadcast %5 : vector<1x96xf32> to vector<2x96xf32>
    %7 = arith.addf %4, %6 : vector<2x96xf32>
    %8 = vector.extract_strided_slice %7 {offsets = [0, 0], sizes = [2, 32], strides = [1, 1]} : vector<2x96xf32> to vector<2x32xf32>
    %9 = vector.extract_strided_slice %7 {offsets = [0, 32], sizes = [2, 32], strides = [1, 1]} : vector<2x96xf32> to vector<2x32xf32>
    %10 = vector.extract_strided_slice %7 {offsets = [0, 64], sizes = [2, 32], strides = [1, 1]} : vector<2x96xf32> to vector<2x32xf32>
    %c0_8 = arith.constant 0 : index
    %c0_9 = arith.constant 0 : index
    %11 = vector.load %arg8[%c0_8, %c0_9] : memref<32x64xf32, #tpu.memory_space<vmem>>, vector<32x64xf32>
    %cst_10 = arith.constant dense<0.000000e+00> : vector<16x64xf32>
    %12 = tpu.matmul %1, %11, %cst_10 {dimension_numbers = #tpu.dot_dimension_numbers<[1], [0], [0], [1], [0, 0, 1, 1], [], []>} : vector<16x32xf32>, vector<32x64xf32>, vector<16x64xf32> -> vector<16x64xf32>
    %c0_11 = arith.constant 0 : index
    %c0_12 = arith.constant 0 : index
    %13 = vector.load %arg9[%c0_11, %c0_12] : memref<1x64xf32, #tpu.memory_space<vmem>>, vector<1x64xf32>
    %14 = vector.broadcast %13 : vector<1x64xf32> to vector<16x64xf32>
    %15 = arith.addf %12, %14 : vector<16x64xf32>
    %16 = vector.extract_strided_slice %15 {offsets = [0, 0], sizes = [16, 32], strides = [1, 1]} : vector<16x64xf32> to vector<16x32xf32>
    %17 = vector.shape_cast %16 : vector<16x32xf32> to vector<2x8x32xf32>
    %18 = vector.extract_strided_slice %15 {offsets = [0, 32], sizes = [16, 32], strides = [1, 1]} : vector<16x64xf32> to vector<16x32xf32>
    %19 = vector.shape_cast %18 : vector<16x32xf32> to vector<2x8x32xf32>
    %c0_13 = arith.constant 0 : index
    %c0_14 = arith.constant 0 : index
    %20 = vector.load %arg6[%c0_13, %c0_14] : memref<32x128xf32, #tpu.memory_space<vmem>>, vector<32x128xf32>
    %c0_15 = arith.constant 0 : index
    %c0_16 = arith.constant 0 : index
    %21 = vector.load %arg7[%c0_15, %c0_16] : memref<1x128xf32, #tpu.memory_space<vmem>>, vector<1x128xf32>
    %22 = vector.shape_cast %21 : vector<1x128xf32> to vector<1x128xf32>
    %23 = vector.broadcast %22 : vector<1x128xf32> to vector<2x128xf32>
    %c0_17 = arith.constant 0 : index
    %c0_18 = arith.constant 0 : index
    %24 = vector.load %arg12[%c0_17, %c0_18] : memref<32x32xf32, #tpu.memory_space<vmem>>, vector<32x32xf32>
    %c0_19 = arith.constant 0 : index
    %c0_20 = arith.constant 0 : index
    %25 = vector.load %arg13[%c0_19, %c0_20] : memref<1x32xf32, #tpu.memory_space<vmem>>, vector<1x32xf32>
    %26 = vector.shape_cast %25 : vector<1x32xf32> to vector<1x32xf32>
    %27 = vector.broadcast %26 : vector<1x32xf32> to vector<2x32xf32>
    %c0_21 = arith.constant 0 : index
    %c0_22 = arith.constant 0 : index
    %28 = vector.load %arg10[%c0_21, %c0_22] : memref<1x32xf32, #tpu.memory_space<vmem>>, vector<1x32xf32>
    %29 = vector.shape_cast %28 : vector<1x32xf32> to vector<1x1x32xf32>
    %c0_23 = arith.constant 0 : index
    %c0_24 = arith.constant 0 : index
    %30 = vector.load %arg11[%c0_23, %c0_24] : memref<1x32xf32, #tpu.memory_space<vmem>>, vector<1x32xf32>
    %31 = vector.shape_cast %30 : vector<1x32xf32> to vector<1x1x32xf32>
    %c0_25 = arith.constant 0 : index
    %c0_26 = arith.constant 0 : index
    %32 = vector.load %arg14[%c0_25, %c0_26] : memref<64x32xf32, #tpu.memory_space<vmem>>, vector<64x32xf32>
    %c0_27 = arith.constant 0 : index
    %c0_28 = arith.constant 0 : index
    %33 = vector.load %arg15[%c0_27, %c0_28] : memref<1x32xf32, #tpu.memory_space<vmem>>, vector<1x32xf32>
    %34 = vector.shape_cast %33 : vector<1x32xf32> to vector<1x32xf32>
    %35 = vector.broadcast %34 : vector<1x32xf32> to vector<2x32xf32>
    %c0_29 = arith.constant 0 : index
    %c0_30 = arith.constant 0 : index
    %36 = vector.load %arg16[%c0_29, %c0_30] : memref<96x4xf32, #tpu.memory_space<vmem>>, vector<96x4xf32>
    %c0_31 = arith.constant 0 : index
    %c0_32 = arith.constant 0 : index
    %37 = vector.load %arg17[%c0_31, %c0_32] : memref<1x4xf32, #tpu.memory_space<vmem>>, vector<1x4xf32>
    %38 = vector.shape_cast %37 : vector<1x4xf32> to vector<1x4xf32>
    %39 = vector.broadcast %38 : vector<1x4xf32> to vector<2x4xf32>
    %40 = tpu.iota {dimensions = array<i32: 1>} : vector<2x8xi32>
    %c0_33 = arith.constant 0 : index
    %c0_34 = arith.constant 0 : index
    %41 = vector.load %arg2[%c0_33, %c0_34] : memref<2x32xf32, #tpu.memory_space<vmem>>, vector<2x32xf32>
    %cst_35 = arith.constant dense<0.000000e+00> : vector<2x128xf32>
    %42 = tpu.matmul %41, %20, %cst_35 {dimension_numbers = #tpu.dot_dimension_numbers<[1], [0], [0], [1], [0, 0, 1, 1], [], []>} : vector<2x32xf32>, vector<32x128xf32>, vector<2x128xf32> -> vector<2x128xf32>
    %43 = arith.addf %42, %23 : vector<2x128xf32>
    %44 = vector.extract_strided_slice %43 {offsets = [0, 0], sizes = [2, 96], strides = [1, 1]} : vector<2x128xf32> to vector<2x96xf32>
    %c0_i32 = arith.constant 0 : i32
    %45 = vector.extract_strided_slice %44 {offsets = [0, 0], sizes = [2, 32], strides = [1, 1]} : vector<2x96xf32> to vector<2x32xf32>
    %46 = arith.addf %8, %45 : vector<2x32xf32>
    %47 = arith.negf %46 : vector<2x32xf32>
    %48 = math.exp %47 : vector<2x32xf32>
    %cst_36 = arith.constant 1.000000e+00 : f32
    %49 = vector.broadcast %cst_36 : f32 to vector<2x32xf32>
    %50 = arith.addf %49, %48 : vector<2x32xf32>
    %51 = arith.divf %49, %50 : vector<2x32xf32>
    %52 = vector.extract_strided_slice %44 {offsets = [0, 32], sizes = [2, 32], strides = [1, 1]} : vector<2x96xf32> to vector<2x32xf32>
    %53 = arith.addf %9, %52 : vector<2x32xf32>
    %54 = arith.negf %53 : vector<2x32xf32>
    %55 = math.exp %54 : vector<2x32xf32>
    %cst_37 = arith.constant 1.000000e+00 : f32
    %56 = vector.broadcast %cst_37 : f32 to vector<2x32xf32>
    %57 = arith.addf %56, %55 : vector<2x32xf32>
    %58 = arith.divf %56, %57 : vector<2x32xf32>
    %59 = vector.extract_strided_slice %44 {offsets = [0, 64], sizes = [2, 32], strides = [1, 1]} : vector<2x96xf32> to vector<2x32xf32>
    %60 = arith.mulf %51, %59 : vector<2x32xf32>
    %61 = arith.addf %10, %60 : vector<2x32xf32>
    %62 = math.tanh %61 : vector<2x32xf32>
    %cst_38 = arith.constant 1.000000e+00 : f32
    %63 = vector.broadcast %cst_38 : f32 to vector<2x32xf32>
    %64 = arith.subf %63, %58 : vector<2x32xf32>
    %65 = arith.mulf %64, %62 : vector<2x32xf32>
    %66 = arith.mulf %58, %41 : vector<2x32xf32>
    %67 = arith.addf %65, %66 : vector<2x32xf32>
    %cst_39 = arith.constant dense<0.000000e+00> : vector<2x128xf32>
    %68 = tpu.matmul %67, %20, %cst_39 {dimension_numbers = #tpu.dot_dimension_numbers<[1], [0], [0], [1], [0, 0, 1, 1], [], []>} : vector<2x32xf32>, vector<32x128xf32>, vector<2x128xf32> -> vector<2x128xf32>
    %69 = arith.addf %68, %23 : vector<2x128xf32>
    %70 = vector.extract_strided_slice %69 {offsets = [0, 0], sizes = [2, 96], strides = [1, 1]} : vector<2x128xf32> to vector<2x96xf32>
    %71 = vector.extract_strided_slice %69 {offsets = [0, 96], sizes = [2, 32], strides = [1, 1]} : vector<2x128xf32> to vector<2x32xf32>
    %72 = vector.shape_cast %71 : vector<2x32xf32> to vector<2x1x32xf32>
    %73 = vector.broadcast %72 : vector<2x1x32xf32> to vector<2x8x32xf32>
    %74 = arith.addf %73, %17 : vector<2x8x32xf32>
    %75 = math.tanh %74 : vector<2x8x32xf32>
    %76 = vector.broadcast %29 : vector<1x1x32xf32> to vector<2x8x32xf32>
    %77 = arith.mulf %75, %76 : vector<2x8x32xf32>
    %cst_40 = arith.constant dense<0.000000e+00> : vector<2x8xf32>
    %78 = vector.multi_reduction <add>, %77, %cst_40 [2] : vector<2x8x32xf32> to vector<2x8xf32>
    %cst_41 = arith.constant dense<0xFF800000> : vector<2xf32>
    %79 = vector.multi_reduction <maximumf>, %78, %cst_41 [1] : vector<2x8xf32> to vector<2xf32>
    %80 = vector.shape_cast %79 : vector<2xf32> to vector<2x1xf32>
    %81 = vector.broadcast %80 : vector<2x1xf32> to vector<2x8xf32>
    %82 = arith.cmpf oeq, %78, %81 : vector<2x8xf32>
    %c8_i32 = arith.constant 8 : i32
    %83 = vector.broadcast %c8_i32 : i32 to vector<2x8xi32>
    %84 = arith.select %82, %40, %83 : vector<2x8xi1>, vector<2x8xi32>
    %cst_42 = arith.constant dense<2147483647> : vector<2xi32>
    %85 = vector.multi_reduction <minsi>, %84, %cst_42 [1] : vector<2x8xi32> to vector<2xi32>
    %86 = vector.shape_cast %85 : vector<2xi32> to vector<2x1xi32>
    %87 = vector.broadcast %86 : vector<2x1xi32> to vector<2x8xi32>
    %88 = arith.cmpi eq, %40, %87 : vector<2x8xi32>
    %89 = arith.extui %88 : vector<2x8xi1> to vector<2x8xi32>
    %90 = arith.sitofp %89 : vector<2x8xi32> to vector<2x8xf32>
    %91 = vector.shape_cast %90 : vector<2x8xf32> to vector<2x8x1xf32>
    %92 = vector.broadcast %91 : vector<2x8x1xf32> to vector<2x8x32xf32>
    %93 = arith.mulf %0, %92 : vector<2x8x32xf32>
    %cst_43 = arith.constant dense<0.000000e+00> : vector<2x32xf32>
    %94 = vector.multi_reduction <add>, %93, %cst_43 [1] : vector<2x8x32xf32> to vector<2x32xf32>
    %95 = tpu.concatenate %94, %67 in 1 : vector<2x32xf32>, vector<2x32xf32> -> vector<2x64xf32>
    %cst_44 = arith.constant dense<0.000000e+00> : vector<2x32xf32>
    %96 = tpu.matmul %95, %32, %cst_44 {dimension_numbers = #tpu.dot_dimension_numbers<[1], [0], [0], [1], [0, 0, 1, 1], [], []>} : vector<2x64xf32>, vector<64x32xf32>, vector<2x32xf32> -> vector<2x32xf32>
    %97 = arith.addf %96, %35 : vector<2x32xf32>
    %cst_45 = arith.constant dense<0.000000e+00> : vector<2x32xf32>
    %98 = tpu.matmul %97, %24, %cst_45 {dimension_numbers = #tpu.dot_dimension_numbers<[1], [0], [0], [1], [0, 0, 1, 1], [], []>} : vector<2x32xf32>, vector<32x32xf32>, vector<2x32xf32> -> vector<2x32xf32>
    %99 = arith.addf %98, %27 : vector<2x32xf32>
    %100 = vector.shape_cast %99 : vector<2x32xf32> to vector<2x1x32xf32>
    %101 = vector.broadcast %100 : vector<2x1x32xf32> to vector<2x8x32xf32>
    %102 = arith.addf %101, %19 : vector<2x8x32xf32>
    %103 = math.tanh %102 : vector<2x8x32xf32>
    %104 = vector.broadcast %31 : vector<1x1x32xf32> to vector<2x8x32xf32>
    %105 = arith.mulf %103, %104 : vector<2x8x32xf32>
    %cst_46 = arith.constant dense<0.000000e+00> : vector<2x8xf32>
    %106 = vector.multi_reduction <add>, %105, %cst_46 [2] : vector<2x8x32xf32> to vector<2x8xf32>
    %cst_47 = arith.constant dense<0xFF800000> : vector<2xf32>
    %107 = vector.multi_reduction <maximumf>, %106, %cst_47 [1] : vector<2x8xf32> to vector<2xf32>
    %108 = vector.shape_cast %107 : vector<2xf32> to vector<2x1xf32>
    %109 = vector.broadcast %108 : vector<2x1xf32> to vector<2x8xf32>
    %110 = arith.cmpf oeq, %106, %109 : vector<2x8xf32>
    %c8_i32_48 = arith.constant 8 : i32
    %111 = vector.broadcast %c8_i32_48 : i32 to vector<2x8xi32>
    %112 = arith.select %110, %40, %111 : vector<2x8xi1>, vector<2x8xi32>
    %cst_49 = arith.constant dense<2147483647> : vector<2xi32>
    %113 = vector.multi_reduction <minsi>, %112, %cst_49 [1] : vector<2x8xi32> to vector<2xi32>
    %114 = vector.shape_cast %113 : vector<2xi32> to vector<2x1xi32>
    %115 = vector.broadcast %114 : vector<2x1xi32> to vector<2x8xi32>
    %116 = arith.cmpi eq, %40, %115 : vector<2x8xi32>
    %117 = arith.extui %116 : vector<2x8xi1> to vector<2x8xi32>
    %118 = arith.sitofp %117 : vector<2x8xi32> to vector<2x8xf32>
    %119 = vector.shape_cast %118 : vector<2x8xf32> to vector<2x8x1xf32>
    %120 = vector.broadcast %119 : vector<2x8x1xf32> to vector<2x8x32xf32>
    %121 = arith.mulf %0, %120 : vector<2x8x32xf32>
    %cst_50 = arith.constant dense<0.000000e+00> : vector<2x32xf32>
    %122 = vector.multi_reduction <add>, %121, %cst_50 [1] : vector<2x8x32xf32> to vector<2x32xf32>
    %123 = tpu.concatenate %122, %94, %67 in 1 : vector<2x32xf32>, vector<2x32xf32>, vector<2x32xf32> -> vector<2x96xf32>
    %cst_51 = arith.constant dense<0.000000e+00> : vector<2x4xf32>
    %124 = tpu.matmul %123, %36, %cst_51 {dimension_numbers = #tpu.dot_dimension_numbers<[1], [0], [0], [1], [0, 0, 1, 1], [], []>} : vector<2x96xf32>, vector<96x4xf32>, vector<2x4xf32> -> vector<2x4xf32>
    %125 = arith.addf %124, %39 : vector<2x4xf32>
    %126 = arith.index_cast %c0_i32 : i32 to index
    %c0_52 = arith.constant 0 : index
    %c0_53 = arith.constant 0 : index
    %127 = vector.load %arg18[%126, %c0_52, %c0_53] : memref<3x2x8xf32, #tpu.memory_space<vmem>>, vector<1x2x8xf32>
    %128 = vector.shape_cast %127 : vector<1x2x8xf32> to vector<2x8xf32>
    %129 = vector.shape_cast %106 : vector<2x8xf32> to vector<1x2x8xf32>
    tpu.vector_store %arg18[%126, %c0_52, %c0_53], %129 {strides = array<i32>} : memref<3x2x8xf32, #tpu.memory_space<vmem>>, vector<1x2x8xf32>,
    %130 = arith.index_cast %c0_i32 : i32 to index
    %c0_54 = arith.constant 0 : index
    %c0_55 = arith.constant 0 : index
    %131 = vector.load %arg19[%130, %c0_54, %c0_55] : memref<3x2x8xf32, #tpu.memory_space<vmem>>, vector<1x2x8xf32>
    %132 = vector.shape_cast %131 : vector<1x2x8xf32> to vector<2x8xf32>
    %133 = vector.shape_cast %78 : vector<2x8xf32> to vector<1x2x8xf32>
    tpu.vector_store %arg19[%130, %c0_54, %c0_55], %133 {strides = array<i32>} : memref<3x2x8xf32, #tpu.memory_space<vmem>>, vector<1x2x8xf32>,
    %134 = arith.index_cast %c0_i32 : i32 to index
    %c0_56 = arith.constant 0 : index
    %c0_57 = arith.constant 0 : index
    %135 = vector.load %arg20[%134, %c0_56, %c0_57] : memref<3x2x4xf32, #tpu.memory_space<vmem>>, vector<1x2x4xf32>
    %136 = vector.shape_cast %135 : vector<1x2x4xf32> to vector<2x4xf32>
    %137 = vector.shape_cast %125 : vector<2x4xf32> to vector<1x2x4xf32>
    tpu.vector_store %arg20[%134, %c0_56, %c0_57], %137 {strides = array<i32>} : memref<3x2x4xf32, #tpu.memory_space<vmem>>, vector<1x2x4xf32>,
    %c1_i32 = arith.constant 1 : i32
    %138 = vector.extract_strided_slice %70 {offsets = [0, 0], sizes = [2, 32], strides = [1, 1]} : vector<2x96xf32> to vector<2x32xf32>
    %139 = arith.addf %8, %138 : vector<2x32xf32>
    %140 = arith.negf %139 : vector<2x32xf32>
    %141 = math.exp %140 : vector<2x32xf32>
    %cst_58 = arith.constant 1.000000e+00 : f32
    %142 = vector.broadcast %cst_58 : f32 to vector<2x32xf32>
    %143 = arith.addf %142, %141 : vector<2x32xf32>
    %144 = arith.divf %142, %143 : vector<2x32xf32>
    %145 = vector.extract_strided_slice %70 {offsets = [0, 32], sizes = [2, 32], strides = [1, 1]} : vector<2x96xf32> to vector<2x32xf32>
    %146 = arith.addf %9, %145 : vector<2x32xf32>
    %147 = arith.negf %146 : vector<2x32xf32>
    %148 = math.exp %147 : vector<2x32xf32>
    %cst_59 = arith.constant 1.000000e+00 : f32
    %149 = vector.broadcast %cst_59 : f32 to vector<2x32xf32>
    %150 = arith.addf %149, %148 : vector<2x32xf32>
    %151 = arith.divf %149, %150 : vector<2x32xf32>
    %152 = vector.extract_strided_slice %70 {offsets = [0, 64], sizes = [2, 32], strides = [1, 1]} : vector<2x96xf32> to vector<2x32xf32>
    %153 = arith.mulf %144, %152 : vector<2x32xf32>
    %154 = arith.addf %10, %153 : vector<2x32xf32>
    %155 = math.tanh %154 : vector<2x32xf32>
    %cst_60 = arith.constant 1.000000e+00 : f32
    %156 = vector.broadcast %cst_60 : f32 to vector<2x32xf32>
    %157 = arith.subf %156, %151 : vector<2x32xf32>
    %158 = arith.mulf %157, %155 : vector<2x32xf32>
    %159 = arith.mulf %151, %67 : vector<2x32xf32>
    %160 = arith.addf %158, %159 : vector<2x32xf32>
    %cst_61 = arith.constant dense<0.000000e+00> : vector<2x128xf32>
    %161 = tpu.matmul %160, %20, %cst_61 {dimension_numbers = #tpu.dot_dimension_numbers<[1], [0], [0], [1], [0, 0, 1, 1], [], []>} : vector<2x32xf32>, vector<32x128xf32>, vector<2x128xf32> -> vector<2x128xf32>
    %162 = arith.addf %161, %23 : vector<2x128xf32>
    %163 = vector.extract_strided_slice %162 {offsets = [0, 0], sizes = [2, 96], strides = [1, 1]} : vector<2x128xf32> to vector<2x96xf32>
    %164 = vector.extract_strided_slice %162 {offsets = [0, 96], sizes = [2, 32], strides = [1, 1]} : vector<2x128xf32> to vector<2x32xf32>
    %165 = vector.shape_cast %164 : vector<2x32xf32> to vector<2x1x32xf32>
    %166 = vector.broadcast %165 : vector<2x1x32xf32> to vector<2x8x32xf32>
    %167 = arith.addf %166, %17 : vector<2x8x32xf32>
    %168 = math.tanh %167 : vector<2x8x32xf32>
    %169 = vector.broadcast %29 : vector<1x1x32xf32> to vector<2x8x32xf32>
    %170 = arith.mulf %168, %169 : vector<2x8x32xf32>
    %cst_62 = arith.constant dense<0.000000e+00> : vector<2x8xf32>
    %171 = vector.multi_reduction <add>, %170, %cst_62 [2] : vector<2x8x32xf32> to vector<2x8xf32>
    %cst_63 = arith.constant dense<0xFF800000> : vector<2xf32>
    %172 = vector.multi_reduction <maximumf>, %171, %cst_63 [1] : vector<2x8xf32> to vector<2xf32>
    %173 = vector.shape_cast %172 : vector<2xf32> to vector<2x1xf32>
    %174 = vector.broadcast %173 : vector<2x1xf32> to vector<2x8xf32>
    %175 = arith.cmpf oeq, %171, %174 : vector<2x8xf32>
    %c8_i32_64 = arith.constant 8 : i32
    %176 = vector.broadcast %c8_i32_64 : i32 to vector<2x8xi32>
    %177 = arith.select %175, %40, %176 : vector<2x8xi1>, vector<2x8xi32>
    %cst_65 = arith.constant dense<2147483647> : vector<2xi32>
    %178 = vector.multi_reduction <minsi>, %177, %cst_65 [1] : vector<2x8xi32> to vector<2xi32>
    %179 = vector.shape_cast %178 : vector<2xi32> to vector<2x1xi32>
    %180 = vector.broadcast %179 : vector<2x1xi32> to vector<2x8xi32>
    %181 = arith.cmpi eq, %40, %180 : vector<2x8xi32>
    %182 = arith.extui %181 : vector<2x8xi1> to vector<2x8xi32>
    %183 = arith.sitofp %182 : vector<2x8xi32> to vector<2x8xf32>
    %184 = vector.shape_cast %183 : vector<2x8xf32> to vector<2x8x1xf32>
    %185 = vector.broadcast %184 : vector<2x8x1xf32> to vector<2x8x32xf32>
    %186 = arith.mulf %0, %185 : vector<2x8x32xf32>
    %cst_66 = arith.constant dense<0.000000e+00> : vector<2x32xf32>
    %187 = vector.multi_reduction <add>, %186, %cst_66 [1] : vector<2x8x32xf32> to vector<2x32xf32>
    %188 = tpu.concatenate %187, %160 in 1 : vector<2x32xf32>, vector<2x32xf32> -> vector<2x64xf32>
    %cst_67 = arith.constant dense<0.000000e+00> : vector<2x32xf32>
    %189 = tpu.matmul %188, %32, %cst_67 {dimension_numbers = #tpu.dot_dimension_numbers<[1], [0], [0], [1], [0, 0, 1, 1], [], []>} : vector<2x64xf32>, vector<64x32xf32>, vector<2x32xf32> -> vector<2x32xf32>
    %190 = arith.addf %189, %35 : vector<2x32xf32>
    %cst_68 = arith.constant dense<0.000000e+00> : vector<2x32xf32>
    %191 = tpu.matmul %190, %24, %cst_68 {dimension_numbers = #tpu.dot_dimension_numbers<[1], [0], [0], [1], [0, 0, 1, 1], [], []>} : vector<2x32xf32>, vector<32x32xf32>, vector<2x32xf32> -> vector<2x32xf32>
    %192 = arith.addf %191, %27 : vector<2x32xf32>
    %193 = vector.shape_cast %192 : vector<2x32xf32> to vector<2x1x32xf32>
    %194 = vector.broadcast %193 : vector<2x1x32xf32> to vector<2x8x32xf32>
    %195 = arith.addf %194, %19 : vector<2x8x32xf32>
    %196 = math.tanh %195 : vector<2x8x32xf32>
    %197 = vector.broadcast %31 : vector<1x1x32xf32> to vector<2x8x32xf32>
    %198 = arith.mulf %196, %197 : vector<2x8x32xf32>
    %cst_69 = arith.constant dense<0.000000e+00> : vector<2x8xf32>
    %199 = vector.multi_reduction <add>, %198, %cst_69 [2] : vector<2x8x32xf32> to vector<2x8xf32>
    %cst_70 = arith.constant dense<0xFF800000> : vector<2xf32>
    %200 = vector.multi_reduction <maximumf>, %199, %cst_70 [1] : vector<2x8xf32> to vector<2xf32>
    %201 = vector.shape_cast %200 : vector<2xf32> to vector<2x1xf32>
    %202 = vector.broadcast %201 : vector<2x1xf32> to vector<2x8xf32>
    %203 = arith.cmpf oeq, %199, %202 : vector<2x8xf32>
    %c8_i32_71 = arith.constant 8 : i32
    %204 = vector.broadcast %c8_i32_71 : i32 to vector<2x8xi32>
    %205 = arith.select %203, %40, %204 : vector<2x8xi1>, vector<2x8xi32>
    %cst_72 = arith.constant dense<2147483647> : vector<2xi32>
    %206 = vector.multi_reduction <minsi>, %205, %cst_72 [1] : vector<2x8xi32> to vector<2xi32>
    %207 = vector.shape_cast %206 : vector<2xi32> to vector<2x1xi32>
    %208 = vector.broadcast %207 : vector<2x1xi32> to vector<2x8xi32>
    %209 = arith.cmpi eq, %40, %208 : vector<2x8xi32>
    %210 = arith.extui %209 : vector<2x8xi1> to vector<2x8xi32>
    %211 = arith.sitofp %210 : vector<2x8xi32> to vector<2x8xf32>
    %212 = vector.shape_cast %211 : vector<2x8xf32> to vector<2x8x1xf32>
    %213 = vector.broadcast %212 : vector<2x8x1xf32> to vector<2x8x32xf32>
    %214 = arith.mulf %0, %213 : vector<2x8x32xf32>
    %cst_73 = arith.constant dense<0.000000e+00> : vector<2x32xf32>
    %215 = vector.multi_reduction <add>, %214, %cst_73 [1] : vector<2x8x32xf32> to vector<2x32xf32>
    %216 = tpu.concatenate %215, %187, %160 in 1 : vector<2x32xf32>, vector<2x32xf32>, vector<2x32xf32> -> vector<2x96xf32>
    %cst_74 = arith.constant dense<0.000000e+00> : vector<2x4xf32>
    %217 = tpu.matmul %216, %36, %cst_74 {dimension_numbers = #tpu.dot_dimension_numbers<[1], [0], [0], [1], [0, 0, 1, 1], [], []>} : vector<2x96xf32>, vector<96x4xf32>, vector<2x4xf32> -> vector<2x4xf32>
    %218 = arith.addf %217, %39 : vector<2x4xf32>
    %219 = arith.index_cast %c1_i32 : i32 to index
    %c0_75 = arith.constant 0 : index
    %c0_76 = arith.constant 0 : index
    %220 = vector.load %arg18[%219, %c0_75, %c0_76] : memref<3x2x8xf32, #tpu.memory_space<vmem>>, vector<1x2x8xf32>
    %221 = vector.shape_cast %220 : vector<1x2x8xf32> to vector<2x8xf32>
    %222 = vector.shape_cast %199 : vector<2x8xf32> to vector<1x2x8xf32>
    tpu.vector_store %arg18[%219, %c0_75, %c0_76], %222 {strides = array<i32>} : memref<3x2x8xf32, #tpu.memory_space<vmem>>, vector<1x2x8xf32>,
    %223 = arith.index_cast %c1_i32 : i32 to index
    %c0_77 = arith.constant 0 : index
    %c0_78 = arith.constant 0 : index
    %224 = vector.load %arg19[%223, %c0_77, %c0_78] : memref<3x2x8xf32, #tpu.memory_space<vmem>>, vector<1x2x8xf32>
    %225 = vector.shape_cast %224 : vector<1x2x8xf32> to vector<2x8xf32>
    %226 = vector.shape_cast %171 : vector<2x8xf32> to vector<1x2x8xf32>
    tpu.vector_store %arg19[%223, %c0_77, %c0_78], %226 {strides = array<i32>} : memref<3x2x8xf32, #tpu.memory_space<vmem>>, vector<1x2x8xf32>,
    %227 = arith.index_cast %c1_i32 : i32 to index
    %c0_79 = arith.constant 0 : index
    %c0_80 = arith.constant 0 : index
    %228 = vector.load %arg20[%227, %c0_79, %c0_80] : memref<3x2x4xf32, #tpu.memory_space<vmem>>, vector<1x2x4xf32>
    %229 = vector.shape_cast %228 : vector<1x2x4xf32> to vector<2x4xf32>
    %230 = vector.shape_cast %218 : vector<2x4xf32> to vector<1x2x4xf32>
    tpu.vector_store %arg20[%227, %c0_79, %c0_80], %230 {strides = array<i32>} : memref<3x2x4xf32, #tpu.memory_space<vmem>>, vector<1x2x4xf32>,
    %c2_i32 = arith.constant 2 : i32
    %231 = vector.extract_strided_slice %163 {offsets = [0, 0], sizes = [2, 32], strides = [1, 1]} : vector<2x96xf32> to vector<2x32xf32>
    %232 = arith.addf %8, %231 : vector<2x32xf32>
    %233 = arith.negf %232 : vector<2x32xf32>
    %234 = math.exp %233 : vector<2x32xf32>
    %cst_81 = arith.constant 1.000000e+00 : f32
    %235 = vector.broadcast %cst_81 : f32 to vector<2x32xf32>
    %236 = arith.addf %235, %234 : vector<2x32xf32>
    %237 = arith.divf %235, %236 : vector<2x32xf32>
    %238 = vector.extract_strided_slice %163 {offsets = [0, 32], sizes = [2, 32], strides = [1, 1]} : vector<2x96xf32> to vector<2x32xf32>
    %239 = arith.addf %9, %238 : vector<2x32xf32>
    %240 = arith.negf %239 : vector<2x32xf32>
    %241 = math.exp %240 : vector<2x32xf32>
    %cst_82 = arith.constant 1.000000e+00 : f32
    %242 = vector.broadcast %cst_82 : f32 to vector<2x32xf32>
    %243 = arith.addf %242, %241 : vector<2x32xf32>
    %244 = arith.divf %242, %243 : vector<2x32xf32>
    %245 = vector.extract_strided_slice %163 {offsets = [0, 64], sizes = [2, 32], strides = [1, 1]} : vector<2x96xf32> to vector<2x32xf32>
    %246 = arith.mulf %237, %245 : vector<2x32xf32>
    %247 = arith.addf %10, %246 : vector<2x32xf32>
    %248 = math.tanh %247 : vector<2x32xf32>
    %cst_83 = arith.constant 1.000000e+00 : f32
    %249 = vector.broadcast %cst_83 : f32 to vector<2x32xf32>
    %250 = arith.subf %249, %244 : vector<2x32xf32>
    %251 = arith.mulf %250, %248 : vector<2x32xf32>
    %252 = arith.mulf %244, %160 : vector<2x32xf32>
    %253 = arith.addf %251, %252 : vector<2x32xf32>
    %cst_84 = arith.constant dense<0.000000e+00> : vector<2x128xf32>
    %254 = tpu.matmul %253, %20, %cst_84 {dimension_numbers = #tpu.dot_dimension_numbers<[1], [0], [0], [1], [0, 0, 1, 1], [], []>} : vector<2x32xf32>, vector<32x128xf32>, vector<2x128xf32> -> vector<2x128xf32>
    %255 = arith.addf %254, %23 : vector<2x128xf32>
    %256 = vector.extract_strided_slice %255 {offsets = [0, 0], sizes = [2, 96], strides = [1, 1]} : vector<2x128xf32> to vector<2x96xf32>
    %257 = vector.extract_strided_slice %255 {offsets = [0, 96], sizes = [2, 32], strides = [1, 1]} : vector<2x128xf32> to vector<2x32xf32>
    %258 = vector.shape_cast %257 : vector<2x32xf32> to vector<2x1x32xf32>
    %259 = vector.broadcast %258 : vector<2x1x32xf32> to vector<2x8x32xf32>
    %260 = arith.addf %259, %17 : vector<2x8x32xf32>
    %261 = math.tanh %260 : vector<2x8x32xf32>
    %262 = vector.broadcast %29 : vector<1x1x32xf32> to vector<2x8x32xf32>
    %263 = arith.mulf %261, %262 : vector<2x8x32xf32>
    %cst_85 = arith.constant dense<0.000000e+00> : vector<2x8xf32>
    %264 = vector.multi_reduction <add>, %263, %cst_85 [2] : vector<2x8x32xf32> to vector<2x8xf32>
    %cst_86 = arith.constant dense<0xFF800000> : vector<2xf32>
    %265 = vector.multi_reduction <maximumf>, %264, %cst_86 [1] : vector<2x8xf32> to vector<2xf32>
    %266 = vector.shape_cast %265 : vector<2xf32> to vector<2x1xf32>
    %267 = vector.broadcast %266 : vector<2x1xf32> to vector<2x8xf32>
    %268 = arith.cmpf oeq, %264, %267 : vector<2x8xf32>
    %c8_i32_87 = arith.constant 8 : i32
    %269 = vector.broadcast %c8_i32_87 : i32 to vector<2x8xi32>
    %270 = arith.select %268, %40, %269 : vector<2x8xi1>, vector<2x8xi32>
    %cst_88 = arith.constant dense<2147483647> : vector<2xi32>
    %271 = vector.multi_reduction <minsi>, %270, %cst_88 [1] : vector<2x8xi32> to vector<2xi32>
    %272 = vector.shape_cast %271 : vector<2xi32> to vector<2x1xi32>
    %273 = vector.broadcast %272 : vector<2x1xi32> to vector<2x8xi32>
    %274 = arith.cmpi eq, %40, %273 : vector<2x8xi32>
    %275 = arith.extui %274 : vector<2x8xi1> to vector<2x8xi32>
    %276 = arith.sitofp %275 : vector<2x8xi32> to vector<2x8xf32>
    %277 = vector.shape_cast %276 : vector<2x8xf32> to vector<2x8x1xf32>
    %278 = vector.broadcast %277 : vector<2x8x1xf32> to vector<2x8x32xf32>
    %279 = arith.mulf %0, %278 : vector<2x8x32xf32>
    %cst_89 = arith.constant dense<0.000000e+00> : vector<2x32xf32>
    %280 = vector.multi_reduction <add>, %279, %cst_89 [1] : vector<2x8x32xf32> to vector<2x32xf32>
    %281 = tpu.concatenate %280, %253 in 1 : vector<2x32xf32>, vector<2x32xf32> -> vector<2x64xf32>
    %cst_90 = arith.constant dense<0.000000e+00> : vector<2x32xf32>
    %282 = tpu.matmul %281, %32, %cst_90 {dimension_numbers = #tpu.dot_dimension_numbers<[1], [0], [0], [1], [0, 0, 1, 1], [], []>} : vector<2x64xf32>, vector<64x32xf32>, vector<2x32xf32> -> vector<2x32xf32>
    %283 = arith.addf %282, %35 : vector<2x32xf32>
    %cst_91 = arith.constant dense<0.000000e+00> : vector<2x32xf32>
    %284 = tpu.matmul %283, %24, %cst_91 {dimension_numbers = #tpu.dot_dimension_numbers<[1], [0], [0], [1], [0, 0, 1, 1], [], []>} : vector<2x32xf32>, vector<32x32xf32>, vector<2x32xf32> -> vector<2x32xf32>
    %285 = arith.addf %284, %27 : vector<2x32xf32>
    %286 = vector.shape_cast %285 : vector<2x32xf32> to vector<2x1x32xf32>
    %287 = vector.broadcast %286 : vector<2x1x32xf32> to vector<2x8x32xf32>
    %288 = arith.addf %287, %19 : vector<2x8x32xf32>
    %289 = math.tanh %288 : vector<2x8x32xf32>
    %290 = vector.broadcast %31 : vector<1x1x32xf32> to vector<2x8x32xf32>
    %291 = arith.mulf %289, %290 : vector<2x8x32xf32>
    %cst_92 = arith.constant dense<0.000000e+00> : vector<2x8xf32>
    %292 = vector.multi_reduction <add>, %291, %cst_92 [2] : vector<2x8x32xf32> to vector<2x8xf32>
    %cst_93 = arith.constant dense<0xFF800000> : vector<2xf32>
    %293 = vector.multi_reduction <maximumf>, %292, %cst_93 [1] : vector<2x8xf32> to vector<2xf32>
    %294 = vector.shape_cast %293 : vector<2xf32> to vector<2x1xf32>
    %295 = vector.broadcast %294 : vector<2x1xf32> to vector<2x8xf32>
    %296 = arith.cmpf oeq, %292, %295 : vector<2x8xf32>
    %c8_i32_94 = arith.constant 8 : i32
    %297 = vector.broadcast %c8_i32_94 : i32 to vector<2x8xi32>
    %298 = arith.select %296, %40, %297 : vector<2x8xi1>, vector<2x8xi32>
    %cst_95 = arith.constant dense<2147483647> : vector<2xi32>
    %299 = vector.multi_reduction <minsi>, %298, %cst_95 [1] : vector<2x8xi32> to vector<2xi32>
    %300 = vector.shape_cast %299 : vector<2xi32> to vector<2x1xi32>
    %301 = vector.broadcast %300 : vector<2x1xi32> to vector<2x8xi32>
    %302 = arith.cmpi eq, %40, %301 : vector<2x8xi32>
    %303 = arith.extui %302 : vector<2x8xi1> to vector<2x8xi32>
    %304 = arith.sitofp %303 : vector<2x8xi32> to vector<2x8xf32>
    %305 = vector.shape_cast %304 : vector<2x8xf32> to vector<2x8x1xf32>
    %306 = vector.broadcast %305 : vector<2x8x1xf32> to vector<2x8x32xf32>
    %307 = arith.mulf %0, %306 : vector<2x8x32xf32>
    %cst_96 = arith.constant dense<0.000000e+00> : vector<2x32xf32>
    %308 = vector.multi_reduction <add>, %307, %cst_96 [1] : vector<2x8x32xf32> to vector<2x32xf32>
    %309 = tpu.concatenate %308, %280, %253 in 1 : vector<2x32xf32>, vector<2x32xf32>, vector<2x32xf32> -> vector<2x96xf32>
    %cst_97 = arith.constant dense<0.000000e+00> : vector<2x4xf32>
    %310 = tpu.matmul %309, %36, %cst_97 {dimension_numbers = #tpu.dot_dimension_numbers<[1], [0], [0], [1], [0, 0, 1, 1], [], []>} : vector<2x96xf32>, vector<96x4xf32>, vector<2x4xf32> -> vector<2x4xf32>
    %311 = arith.addf %310, %39 : vector<2x4xf32>
    %312 = arith.index_cast %c2_i32 : i32 to index
    %c0_98 = arith.constant 0 : index
    %c0_99 = arith.constant 0 : index
    %313 = vector.load %arg18[%312, %c0_98, %c0_99] : memref<3x2x8xf32, #tpu.memory_space<vmem>>, vector<1x2x8xf32>
    %314 = vector.shape_cast %313 : vector<1x2x8xf32> to vector<2x8xf32>
    %315 = vector.shape_cast %292 : vector<2x8xf32> to vector<1x2x8xf32>
    tpu.vector_store %arg18[%312, %c0_98, %c0_99], %315 {strides = array<i32>} : memref<3x2x8xf32, #tpu.memory_space<vmem>>, vector<1x2x8xf32>,
    %316 = arith.index_cast %c2_i32 : i32 to index
    %c0_100 = arith.constant 0 : index
    %c0_101 = arith.constant 0 : index
    %317 = vector.load %arg19[%316, %c0_100, %c0_101] : memref<3x2x8xf32, #tpu.memory_space<vmem>>, vector<1x2x8xf32>
    %318 = vector.shape_cast %317 : vector<1x2x8xf32> to vector<2x8xf32>
    %319 = vector.shape_cast %264 : vector<2x8xf32> to vector<1x2x8xf32>
    tpu.vector_store %arg19[%316, %c0_100, %c0_101], %319 {strides = array<i32>} : memref<3x2x8xf32, #tpu.memory_space<vmem>>, vector<1x2x8xf32>,
    %320 = arith.index_cast %c2_i32 : i32 to index
    %c0_102 = arith.constant 0 : index
    %c0_103 = arith.constant 0 : index
    %321 = vector.load %arg20[%320, %c0_102, %c0_103] : memref<3x2x4xf32, #tpu.memory_space<vmem>>, vector<1x2x4xf32>
    %322 = vector.shape_cast %321 : vector<1x2x4xf32> to vector<2x4xf32>
    %323 = vector.shape_cast %311 : vector<2x4xf32> to vector<1x2x4xf32>
    tpu.vector_store %arg20[%320, %c0_102, %c0_103], %323 {strides = array<i32>} : memref<3x2x4xf32, #tpu.memory_space<vmem>>, vector<1x2x4xf32>,
    %c3_i32 = arith.constant 3 : i32
    %c0_104 = arith.constant 0 : index
    %c0_105 = arith.constant 0 : index
    %324 = vector.load %arg21[%c0_104, %c0_105] : memref<2x32xf32, #tpu.memory_space<vmem>>, vector<2x32xf32>
    tpu.vector_store %arg21[%c0_104, %c0_105], %253 {strides = array<i32>} : memref<2x32xf32, #tpu.memory_space<vmem>>, vector<2x32xf32>,
    return
  }
  func.func @transform_0(%arg0: i32) -> (i32, i32) {
    %c0_i32 = arith.constant 0 : i32
    %c0_i32_0 = arith.constant 0 : i32
    return %arg0, %c0_i32 : i32, i32
  }
  func.func @transform_1(%arg0: i32) -> (i32, i32) {
    %c0_i32 = arith.constant 0 : i32
    %c0_i32_0 = arith.constant 0 : i32
    return %arg0, %c0_i32 : i32, i32
  }
  func.func @transform_2(%arg0: i32) -> (i32, i32, i32) {
    %c0_i32 = arith.constant 0 : i32
    %c0_i32_0 = arith.constant 0 : i32
    %c0_i32_1 = arith.constant 0 : i32
    return %arg0, %c0_i32, %c0_i32_0 : i32, i32, i32
  }
  func.func @transform_3(%arg0: i32) -> (i32, i32) {
    %c0_i32 = arith.constant 0 : i32
    %c0_i32_0 = arith.constant 0 : i32
    %c0_i32_1 = arith.constant 0 : i32
    return %c0_i32, %c0_i32_0 : i32, i32
  }
  func.func @transform_4(%arg0: i32) -> (i32, i32) {
    %c0_i32 = arith.constant 0 : i32
    %c0_i32_0 = arith.constant 0 : i32
    %c0_i32_1 = arith.constant 0 : i32
    return %c0_i32, %c0_i32_0 : i32, i32
  }
  func.func @transform_5(%arg0: i32) -> (i32, i32) {
    %c0_i32 = arith.constant 0 : i32
    %c0_i32_0 = arith.constant 0 : i32
    %c0_i32_1 = arith.constant 0 : i32
    return %c0_i32, %c0_i32_0 : i32, i32
  }
  func.func @transform_6(%arg0: i32) -> (i32, i32) {
    %c0_i32 = arith.constant 0 : i32
    %c0_i32_0 = arith.constant 0 : i32
    %c0_i32_1 = arith.constant 0 : i32
    return %c0_i32, %c0_i32_0 : i32, i32
  }
  func.func @transform_7(%arg0: i32) -> (i32, i32) {
    %c0_i32 = arith.constant 0 : i32
    %c0_i32_0 = arith.constant 0 : i32
    %c0_i32_1 = arith.constant 0 : i32
    return %c0_i32, %c0_i32_0 : i32, i32
  }
  func.func @transform_8(%arg0: i32) -> (i32, i32) {
    %c0_i32 = arith.constant 0 : i32
    %c0_i32_0 = arith.constant 0 : i32
    %c0_i32_1 = arith.constant 0 : i32
    return %c0_i32, %c0_i32_0 : i32, i32
  }
  func.func @transform_9(%arg0: i32) -> (i32, i32) {
    %c0_i32 = arith.constant 0 : i32
    %c0_i32_0 = arith.constant 0 : i32
    %c0_i32_1 = arith.constant 0 : i32
    return %c0_i32, %c0_i32_0 : i32, i32
  }
  func.func @transform_10(%arg0: i32) -> (i32, i32) {
    %c0_i32 = arith.constant 0 : i32
    %c0_i32_0 = arith.constant 0 : i32
    %c0_i32_1 = arith.constant 0 : i32
    return %c0_i32, %c0_i32_0 : i32, i32
  }
  func.func @transform_11(%arg0: i32) -> (i32, i32) {
    %c0_i32 = arith.constant 0 : i32
    %c0_i32_0 = arith.constant 0 : i32
    %c0_i32_1 = arith.constant 0 : i32
    return %c0_i32, %c0_i32_0 : i32, i32
  }
  func.func @transform_12(%arg0: i32) -> (i32, i32) {
    %c0_i32 = arith.constant 0 : i32
    %c0_i32_0 = arith.constant 0 : i32
    %c0_i32_1 = arith.constant 0 : i32
    return %c0_i32, %c0_i32_0 : i32, i32
  }
  func.func @transform_13(%arg0: i32) -> (i32, i32) {
    %c0_i32 = arith.constant 0 : i32
    %c0_i32_0 = arith.constant 0 : i32
    %c0_i32_1 = arith.constant 0 : i32
    return %c0_i32, %c0_i32_0 : i32, i32
  }
  func.func @transform_14(%arg0: i32) -> (i32, i32) {
    %c0_i32 = arith.constant 0 : i32
    %c0_i32_0 = arith.constant 0 : i32
    %c0_i32_1 = arith.constant 0 : i32
    return %c0_i32, %c0_i32_0 : i32, i32
  }
  func.func @transform_15(%arg0: i32) -> (i32, i32) {
    %c0_i32 = arith.constant 0 : i32
    %c0_i32_0 = arith.constant 0 : i32
    %c0_i32_1 = arith.constant 0 : i32
    return %c0_i32, %c0_i32_0 : i32, i32
  }
  func.func @transform_16(%arg0: i32) -> (i32, i32) {
    %c0_i32 = arith.constant 0 : i32
    %c0_i32_0 = arith.constant 0 : i32
    %c0_i32_1 = arith.constant 0 : i32
    return %c0_i32, %c0_i32_0 : i32, i32
  }
  func.func @transform_17(%arg0: i32) -> (i32, i32, i32) {
    %c0_i32 = arith.constant 0 : i32
    %c0_i32_0 = arith.constant 0 : i32
    %c0_i32_1 = arith.constant 0 : i32
    return %c0_i32, %arg0, %c0_i32_0 : i32, i32, i32
  }
  func.func @transform_18(%arg0: i32) -> (i32, i32, i32) {
    %c0_i32 = arith.constant 0 : i32
    %c0_i32_0 = arith.constant 0 : i32
    %c0_i32_1 = arith.constant 0 : i32
    return %c0_i32, %arg0, %c0_i32_0 : i32, i32, i32
  }
  func.func @transform_19(%arg0: i32) -> (i32, i32, i32) {
    %c0_i32 = arith.constant 0 : i32
    %c0_i32_0 = arith.constant 0 : i32
    %c0_i32_1 = arith.constant 0 : i32
    return %c0_i32, %arg0, %c0_i32_0 : i32, i32, i32
  }
  func.func @transform_20(%arg0: i32) -> (i32, i32) {
    %c0_i32 = arith.constant 0 : i32
    %c0_i32_0 = arith.constant 0 : i32
    return %arg0, %c0_i32 : i32, i32
  }
}

</mosaic_0001>

<llo_original>
// kernel: decoder_forward.1
$region0: #{decoder_forward.1}
  #allocation0 [shape = 'u32[]', space=smem, size = 0x4, offset = 0x4, fixed_abs, tag = 'smem constant byte address 0x4 - core index']
  #allocation1 [shape = 'u32[144,128]{1,0:T(1,128)}', space=vmem, size = 0x12000, scoped, tag = 'internal scratch']
  %s0 = inlined_call_operand.vmem [shape: f32[2,32], index: 0, kind: input, shape index: {}]
  %s1 = inlined_call_operand.vmem [shape: f32[2,32], index: 1, kind: input, shape index: {}]
  %s2 = inlined_call_operand.vmem [shape: f32[2,8,32], index: 2, kind: input, shape index: {}]
  %s3 = inlined_call_operand.vmem [shape: f32[32,96], index: 3, kind: input, shape index: {}]
  %s4 = inlined_call_operand.vmem [shape: f32[1,96], index: 4, kind: input, shape index: {}]
  %s5 = inlined_call_operand.vmem [shape: f32[32,128], index: 5, kind: input, shape index: {}]
  %s6 = inlined_call_operand.vmem [shape: f32[1,128], index: 6, kind: input, shape index: {}]
  %s7 = inlined_call_operand.vmem [shape: f32[32,64], index: 7, kind: input, shape index: {}]
  %s8 = inlined_call_operand.vmem [shape: f32[1,64], index: 8, kind: input, shape index: {}]
  %s9 = inlined_call_operand.vmem [shape: f32[1,32], index: 9, kind: input, shape index: {}]
  %s10 = inlined_call_operand.vmem [shape: f32[1,32], index: 10, kind: input, shape index: {}]
  %s11 = inlined_call_operand.vmem [shape: f32[32,32], index: 11, kind: input, shape index: {}]
  %s12 = inlined_call_operand.vmem [shape: f32[1,32], index: 12, kind: input, shape index: {}]
  %s13 = inlined_call_operand.vmem [shape: f32[64,32], index: 13, kind: input, shape index: {}]
  %s14 = inlined_call_operand.vmem [shape: f32[1,32], index: 14, kind: input, shape index: {}]
  %s15 = inlined_call_operand.vmem [shape: f32[96,4], index: 15, kind: input, shape index: {}]
  %s16 = inlined_call_operand.vmem [shape: f32[1,4], index: 16, kind: input, shape index: {}]
  %s17 = inlined_call_operand.vmem [shape: f32[3,2,8], index: 17, kind: output, shape index: {0}]
  %s18 = inlined_call_operand.vmem [shape: f32[3,2,8], index: 18, kind: output, shape index: {1}]
  %s19 = inlined_call_operand.hbm [shape: f32[3,2,4], index: 19, kind: output, shape index: {2}]
  %s20 = inlined_call_operand.hbm [shape: f32[2,32], index: 20, kind: output, shape index: {3}]
  %21 = xla_tuple %s17, %s18, %s19, %s20
  %s22 = sld [smem:[#allocation0]]
  $region102: #{decoder_forward.1} parent=0
    _
  %s24 = ssub.s32 1, %s22
  %s25 = scalar_select 0, %s24, %s22
  $region1: #{decoder_forward.1} parent=0
    #allocation2 [shape = 'u8[3072]{0}', space=vmem, size = 0xc00, scoped, tag = 'output window, operand 2, single buffered']
    #allocation3 [shape = 's32[1]{0}', space=sflag, size = 0x4, scoped, tag = 'scoped memory for decoder_forward.1']
    #allocation4 [shape = 'u8[1024]{0}', space=vmem, size = 0x400, scoped, tag = 'output window, operand 3, single buffered']
    #allocation5 [shape = 's32[1]{0}', space=sflag, size = 0x4, scoped, tag = 'scoped memory for decoder_forward.1']
    %26 = vsyncpa [#allocation3], 0
    %27 = vsyncpa [#allocation5], 0
    // Predicated region
    $region2: #{decoder_forward.1} parent=1 // pred_check
      _
    $region3: #{decoder_forward.1} parent=1 // pred_check_branch
      %29 = sbr.rel (0) target = $region5
    $region4: #{decoder_forward.1} parent=1 // pred_region
      _
    $region5: #{decoder_forward.1} parent=1 // pred_fallthru
      _
    // Predicated region
    $region6: #{decoder_forward.1} parent=1 // pred_check
      _
    $region7: #{decoder_forward.1} parent=1 // pred_check_branch
      %31 = sbr.rel (0) target = $region9
    $region8: #{decoder_forward.1} parent=1 // pred_region
      _
    $region9: #{decoder_forward.1} parent=1 // pred_fallthru
      _
    // Predicated region
    $region10: #{decoder_forward.1} parent=1 // pred_check
      _
    $region11: #{decoder_forward.1} parent=1 // pred_check_branch
      %33 = sbr.rel (0) target = $region13
    $region12: #{decoder_forward.1} parent=1 // pred_region
      _
    $region13: #{decoder_forward.1} parent=1 // pred_fallthru
      _
    // Predicated region
    $region14: #{decoder_forward.1} parent=1 // pred_check
      _
    $region15: #{decoder_forward.1} parent=1 // pred_check_branch
      %35 = sbr.rel (0) target = $region17
    $region16: #{decoder_forward.1} parent=1 // pred_region
      _
    $region17: #{decoder_forward.1} parent=1 // pred_fallthru
      _
    // Predicated region
    $region18: #{decoder_forward.1} parent=1 // pred_check
      _
    $region19: #{decoder_forward.1} parent=1 // pred_check_branch
      %37 = sbr.rel (0) target = $region21
    $region20: #{decoder_forward.1} parent=1 // pred_region
      _
    $region21: #{decoder_forward.1} parent=1 // pred_fallthru
      _
    // Predicated region
    $region22: #{decoder_forward.1} parent=1 // pred_check
      _
    $region23: #{decoder_forward.1} parent=1 // pred_check_branch
      %39 = sbr.rel (0) target = $region25
    $region24: #{decoder_forward.1} parent=1 // pred_region
      _
    $region25: #{decoder_forward.1} parent=1 // pred_fallthru
      _
    // Predicated region
    $region26: #{decoder_forward.1} parent=1 // pred_check
      _
    $region27: #{decoder_forward.1} parent=1 // pred_check_branch
      %41 = sbr.rel (0) target = $region29
    $region28: #{decoder_forward.1} parent=1 // pred_region
      _
    $region29: #{decoder_forward.1} parent=1 // pred_fallthru
      _
    // Predicated region
    $region30: #{decoder_forward.1} parent=1 // pred_check
      _
    $region31: #{decoder_forward.1} parent=1 // pred_check_branch
      %43 = sbr.rel (0) target = $region33
    $region32: #{decoder_forward.1} parent=1 // pred_region
      _
    $region33: #{decoder_forward.1} parent=1 // pred_fallthru
      _
    // Predicated region
    $region34: #{decoder_forward.1} parent=1 // pred_check
      _
    $region35: #{decoder_forward.1} parent=1 // pred_check_branch
      %45 = sbr.rel (0) target = $region37
    $region36: #{decoder_forward.1} parent=1 // pred_region
      _
    $region37: #{decoder_forward.1} parent=1 // pred_fallthru
      _
    // Predicated region
    $region38: #{decoder_forward.1} parent=1 // pred_check
      _
    $region39: #{decoder_forward.1} parent=1 // pred_check_branch
      %47 = sbr.rel (0) target = $region41
    $region40: #{decoder_forward.1} parent=1 // pred_region
      _
    $region41: #{decoder_forward.1} parent=1 // pred_fallthru
      _
    // Predicated region
    $region42: #{decoder_forward.1} parent=1 // pred_check
      _
    $region43: #{decoder_forward.1} parent=1 // pred_check_branch
      %49 = sbr.rel (0) target = $region45
    $region44: #{decoder_forward.1} parent=1 // pred_region
      _
    $region45: #{decoder_forward.1} parent=1 // pred_fallthru
      _
    // Predicated region
    $region46: #{decoder_forward.1} parent=1 // pred_check
      _
    $region47: #{decoder_forward.1} parent=1 // pred_check_branch
      %51 = sbr.rel (0) target = $region49
    $region48: #{decoder_forward.1} parent=1 // pred_region
      _
    $region49: #{decoder_forward.1} parent=1 // pred_fallthru
      _
    // Predicated region
    $region50: #{decoder_forward.1} parent=1 // pred_check
      _
    $region51: #{decoder_forward.1} parent=1 // pred_check_branch
      %53 = sbr.rel (0) target = $region53
    $region52: #{decoder_forward.1} parent=1 // pred_region
      _
    $region53: #{decoder_forward.1} parent=1 // pred_fallthru
      _
    // Predicated region
    $region54: #{decoder_forward.1} parent=1 // pred_check
      _
    $region55: #{decoder_forward.1} parent=1 // pred_check_branch
      %55 = sbr.rel (0) target = $region57
    $region56: #{decoder_forward.1} parent=1 // pred_region
      _
    $region57: #{decoder_forward.1} parent=1 // pred_fallthru
      _
    // Predicated region
    $region58: #{decoder_forward.1} parent=1 // pred_check
      _
    $region59: #{decoder_forward.1} parent=1 // pred_check_branch
      %57 = sbr.rel (0) target = $region61
    $region60: #{decoder_forward.1} parent=1 // pred_region
      _
    $region61: #{decoder_forward.1} parent=1 // pred_fallthru
      _
    // Predicated region
    $region62: #{decoder_forward.1} parent=1 // pred_check
      _
    $region63: #{decoder_forward.1} parent=1 // pred_check_branch
      %59 = sbr.rel (0) target = $region65
    $region64: #{decoder_forward.1} parent=1 // pred_region
      _
    $region65: #{decoder_forward.1} parent=1 // pred_fallthru
      _
    // Predicated region
    $region66: #{decoder_forward.1} parent=1 // pred_check
      _
    $region67: #{decoder_forward.1} parent=1 // pred_check_branch
      %61 = sbr.rel (0) target = $region69
    $region68: #{decoder_forward.1} parent=1 // pred_region
      _
    $region69: #{decoder_forward.1} parent=1 // pred_fallthru
      _
    %v62 = vld [vmem:[%s2] sm:$0xff]
    %v63 = vld [vmem:[%s2 + $0x8] sm:$0xff]
    %v64 = vld [vmem:[%s0] sm:$0x3]
    %v65 = vld [vmem:[%s3] sm:$0xff]
    %v66 = vld [vmem:[%s3 + $0x8] sm:$0xff]
    %v67 = vld [vmem:[%s3 + $0x10] sm:$0xff]
    %v68 = vld [vmem:[%s3 + $0x18] sm:$0xff]
    %v69 = vld [vmem:[%s4] sm:$0x1]
    %v71 = vlaneseq
    %v72 = vshrl.u32 %v71, 7
    %v73 = vsub.s32 0, %v72
    %v74 = vrot.slane %v69, %v73
    %vm76 = vcmask 261120
    %v78 = vsel %vm76, %v64, 0
    %80 = vmatprep.subr.mxu0 0.0
    %81 = vmatpush1.msra.mxu0 %v65
    %82 = vmatprep.subr.mxu0 0.0
    %83 = vmatpush1.msra.mxu0 %v66
    %84 = vmatprep.subr.mxu0 0.0
    %85 = vmatpush1.msra.mxu0 %v67
    %86 = vmatprep.subr.mxu0 0.0
    %87 = vmatpush1.msra.mxu0 %v68
    %88 = vmatprep.subr.mxu0 0.0
    %89 = vmatpush1.msra.mxu0 0.0
    %90 = vmatprep.subr.mxu0 0.0
    %91 = vmatpush1.msra.mxu0 0.0
    %92 = vmatprep.subr.mxu0 0.0
    %93 = vmatpush1.msra.mxu0 0.0
    %94 = vmatprep.subr.mxu0 0.0
    %95 = vmatpush1.msra.mxu0 0.0
    %96 = vmatprep.subr.mxu0 0.0
    %97 = vmatpush1.msra.mxu0 0.0
    %98 = vmatprep.subr.mxu0 0.0
    %99 = vmatpush1.msra.mxu0 0.0
    %100 = vmatprep.subr.mxu0 0.0
    %101 = vmatpush1.msra.mxu0 0.0
    %102 = vmatprep.subr.mxu0 0.0
    %103 = vmatpush1.msra.mxu0 0.0
    %104 = vmatprep.subr.mxu0 0.0
    %105 = vmatpush1.msra.mxu0 0.0
    %106 = vmatprep.subr.mxu0 0.0
    %107 = vmatpush1.msra.mxu0 0.0
    %108 = vmatprep.subr.mxu0 0.0
    %109 = vmatpush1.msra.mxu0 0.0
    %110 = vmatprep.subr.mxu0 0.0
    %111 = vmatpush1.msra.mxu0 0.0
    %112 = vmatprep.subr.mxu0 0.0
    %113 = vmatpush1.msra.mxu0 0.0
    %114 = vmatprep.subr.mxu0 0.0
    %115 = vmatpush1.msra.mxu0 0.0
    %116 = vmatprep.subr.mxu0 0.0
    %117 = vmatpush1.msra.mxu0 0.0
    %118 = vmatprep.subr.mxu0 0.0
    %119 = vmatpush1.msra.mxu0 0.0
    %120 = vmatprep.subr.mxu0 0.0
    %121 = vmatpush1.msra.mxu0 0.0
    %122 = vmatprep.subr.mxu0 0.0
    %123 = vmatpush1.msra.mxu0 0.0
    %124 = vmatprep.subr.mxu0 0.0
    %125 = vmatpush1.msra.mxu0 0.0
    %126 = vmatprep.subr.mxu0 0.0
    %127 = vmatpush1.msra.mxu0 0.0
    %128 = vmatprep.subr.mxu0 0.0
    %129 = vmatpush1.msra.mxu0 0.0
    %130 = vmatprep.subr.mxu0 0.0
    %131 = vmatpush1.msra.mxu0 0.0
    %132 = vmatprep.subr.mxu0 0.0
    %133 = vmatpush1.msra.mxu0 0.0
    %134 = vmatprep.subr.mxu0 0.0
    %135 = vmatpush1.msra.mxu0 0.0
    %136 = vmatprep.subr.mxu0 0.0
    %137 = vmatpush1.msra.mxu0 0.0
    %138 = vmatprep.subr.mxu0 0.0
    %139 = vmatpush1.msra.mxu0 0.0
    %140 = vmatprep.subr.mxu0 0.0
    %141 = vmatpush1.msra.mxu0 0.0
    %142 = vmatprep.subr.mxu0 0.0
    %143 = vmatpush1.msra.mxu0 0.0
    %144 = vmatprep.mubr.f32.mxu0 0.0
    %145 = vmatmul.mubr.f32.gmra.mrb[0].mxu0 %v78
    %v146 = vpop.f32.mrb[0].mxu0
    %v147 = vadd.f32 %v74, %v146
    %v148 = vpop.f32.mrb[0].mxu0
    %149 = vdwg.mxu0
    %v150 = vld [vmem:[%s7] sm:$0xff]
    %v151 = vld [vmem:[%s7 + $0x8] sm:$0xff]
    %v152 = vld [vmem:[%s7 + $0x10] sm:$0xff]
    %v153 = vld [vmem:[%s7 + $0x18] sm:$0xff]
    %v154 = vld [vmem:[%s8] sm:$0x1]
    %v156 = vlaneseq
    %v157 = vshrl.u32 %v156, 7
    %v158 = vsub.s32 0, %v157
    %v159 = vrot.slane %v154, %v158
    %v162 = vsel %vm76, %v62, 0
    %v165 = vsel %vm76, %v63, 0
    %167 = vmatprep.subr.mxu0 0.0
    %168 = vmatpush1.msra.mxu0 %v150
    %169 = vmatprep.subr.mxu0 0.0
    %170 = vmatpush1.msra.mxu0 %v151
    %171 = vmatprep.subr.mxu0 0.0
    %172 = vmatpush1.msra.mxu0 %v152
    %173 = vmatprep.subr.mxu0 0.0
    %174 = vmatpush1.msra.mxu0 %v153
    %175 = vmatprep.subr.mxu0 0.0
    %176 = vmatpush1.msra.mxu0 0.0
    %177 = vmatprep.subr.mxu0 0.0
    %178 = vmatpush1.msra.mxu0 0.0
    %179 = vmatprep.subr.mxu0 0.0
    %180 = vmatpush1.msra.mxu0 0.0
    %181 = vmatprep.subr.mxu0 0.0
    %182 = vmatpush1.msra.mxu0 0.0
    %183 = vmatprep.subr.mxu0 0.0
    %184 = vmatpush1.msra.mxu0 0.0
    %185 = vmatprep.subr.mxu0 0.0
    %186 = vmatpush1.msra.mxu0 0.0
    %187 = vmatprep.subr.mxu0 0.0
    %188 = vmatpush1.msra.mxu0 0.0
    %189 = vmatprep.subr.mxu0 0.0
    %190 = vmatpush1.msra.mxu0 0.0
    %191 = vmatprep.subr.mxu0 0.0
    %192 = vmatpush1.msra.mxu0 0.0
    %193 = vmatprep.subr.mxu0 0.0
    %194 = vmatpush1.msra.mxu0 0.0
    %195 = vmatprep.subr.mxu0 0.0
    %196 = vmatpush1.msra.mxu0 0.0
    %197 = vmatprep.subr.mxu0 0.0
    %198 = vmatpush1.msra.mxu0 0.0
    %199 = vmatprep.subr.mxu0 0.0
    %200 = vmatpush1.msra.mxu0 0.0
    %201 = vmatprep.subr.mxu0 0.0
    %202 = vmatpush1.msra.mxu0 0.0
    %203 = vmatprep.subr.mxu0 0.0
    %204 = vmatpush1.msra.mxu0 0.0
    %205 = vmatprep.subr.mxu0 0.0
    %206 = vmatpush1.msra.mxu0 0.0
    %207 = vmatprep.subr.mxu0 0.0
    %208 = vmatpush1.msra.mxu0 0.0
    %209 = vmatprep.subr.mxu0 0.0
    %210 = vmatpush1.msra.mxu0 0.0
    %211 = vmatprep.subr.mxu0 0.0
    %212 = vmatpush1.msra.mxu0 0.0
    %213 = vmatprep.subr.mxu0 0.0
    %214 = vmatpush1.msra.mxu0 0.0
    %215 = vmatprep.subr.mxu0 0.0
    %216 = vmatpush1.msra.mxu0 0.0
    %217 = vmatprep.subr.mxu0 0.0
    %218 = vmatpush1.msra.mxu0 0.0
    %219 = vmatprep.subr.mxu0 0.0
    %220 = vmatpush1.msra.mxu0 0.0
    %221 = vmatprep.subr.mxu0 0.0
    %222 = vmatpush1.msra.mxu0 0.0
    %223 = vmatprep.subr.mxu0 0.0
    %224 = vmatpush1.msra.mxu0 0.0
    %225 = vmatprep.subr.mxu0 0.0
    %226 = vmatpush1.msra.mxu0 0.0
    %227 = vmatprep.subr.mxu0 0.0
    %228 = vmatpush1.msra.mxu0 0.0
    %229 = vmatprep.subr.mxu0 0.0
    %230 = vmatpush1.msra.mxu0 0.0
    %231 = vmatprep.mubr.f32.mxu0 0.0
    %232 = vmatmul.mubr.f32.gmra.mrb[0].mxu0 %v162
    %v233 = vpop.f32.mrb[0].mxu0
    %v234 = vadd.f32 %v159, %v233
    %v235 = vpop.f32.mrb[0].mxu0
    %236 = vmatprep.mubr.f32.mxu0 0.0
    %237 = vmatmul.mubr.f32.gmra.mrb[0].mxu0 %v165
    %v238 = vpop.f32.mrb[0].mxu0
    %v239 = vadd.f32 %v159, %v238
    %v240 = vpop.f32.mrb[0].mxu0
    %241 = vdwg.mxu0
    %v242 = vld [vmem:[%s5] sm:$0xff]
    %v243 = vld [vmem:[%s5 + $0x8] sm:$0xff]
    %v244 = vld [vmem:[%s5 + $0x10] sm:$0xff]
    %v245 = vld [vmem:[%s5 + $0x18] sm:$0xff]
    %v246 = vld [vmem:[%s6] sm:$0x1]
    %v248 = vlaneseq
    %v249 = vshrl.u32 %v248, 7
    %v250 = vsub.s32 0, %v249
    %v251 = vrot.slane %v246, %v250
    %v253 = vld [vmem:[%s11] sm:$0xff]
    %v254 = vld [vmem:[%s11 + $0x8] sm:$0xff]
    %v255 = vld [vmem:[%s11 + $0x10] sm:$0xff]
    %v256 = vld [vmem:[%s11 + $0x18] sm:$0xff]
    %v257 = vld [vmem:[%s12] sm:$0x1]
    %v259 = vlaneseq
    %v260 = vshrl.u32 %v259, 7
    %v261 = vsub.s32 0, %v260
    %v262 = vrot.slane %v257, %v261
    %v264 = vld [vmem:[%s9] sm:$0x1]
    %v265 = vld [vmem:[%s10] sm:$0x1]
    %v266 = vld [vmem:[%s13] sm:$0xff]
    %v267 = vld [vmem:[%s13 + $0x8] sm:$0xff]
    %v268 = vld [vmem:[%s13 + $0x10] sm:$0xff]
    %v269 = vld [vmem:[%s13 + $0x18] sm:$0xff]
    %v270 = vld [vmem:[%s13 + $0x20] sm:$0xff]
    %v271 = vld [vmem:[%s13 + $0x28] sm:$0xff]
    %v272 = vld [vmem:[%s13 + $0x30] sm:$0xff]
    %v273 = vld [vmem:[%s13 + $0x38] sm:$0xff]
    %v274 = vld [vmem:[%s14] sm:$0x1]
    %v276 = vlaneseq
    %v277 = vshrl.u32 %v276, 7
    %v278 = vsub.s32 0, %v277
    %v279 = vrot.slane %v274, %v278
    %v281 = vld [vmem:[%s15] sm:$0xff]
    %v282 = vld [vmem:[%s15 + $0x8] sm:$0xff]
    %v283 = vld [vmem:[%s15 + $0x10] sm:$0xff]
    %v284 = vld [vmem:[%s15 + $0x18] sm:$0xff]
    %v285 = vld [vmem:[%s15 + $0x20] sm:$0xff]
    %v286 = vld [vmem:[%s15 + $0x28] sm:$0xff]
    %v287 = vld [vmem:[%s15 + $0x30] sm:$0xff]
    %v288 = vld [vmem:[%s15 + $0x38] sm:$0xff]
    %v289 = vld [vmem:[%s15 + $0x40] sm:$0xff]
    %v290 = vld [vmem:[%s15 + $0x48] sm:$0xff]
    %v291 = vld [vmem:[%s15 + $0x50] sm:$0xff]
    %v292 = vld [vmem:[%s15 + $0x58] sm:$0xff]
    %v293 = vld [vmem:[%s16] sm:$0x1]
    %v295 = vlaneseq
    %v296 = vshrl.u32 %v295, 7
    %v297 = vsub.s32 0, %v296
    %v298 = vrot.slane %v293, %v297
    %v300 = vlaneseq
    %v301 = vand.u32 %v300, 127
    %v302 = vld [vmem:[%s1] sm:$0x3]
    %v304 = vsel %vm76, %v302, 0
    %306 = vmatprep.subr.mxu0 0.0
    %307 = vmatpush1.msra.mxu0 %v242
    %308 = vmatprep.subr.mxu0 0.0
    %309 = vmatpush1.msra.mxu0 %v243
    %310 = vmatprep.subr.mxu0 0.0
    %311 = vmatpush1.msra.mxu0 %v244
    %312 = vmatprep.subr.mxu0 0.0
    %313 = vmatpush1.msra.mxu0 %v245
    %314 = vmatprep.subr.mxu0 0.0
    %315 = vmatpush1.msra.mxu0 0.0
    %316 = vmatprep.subr.mxu0 0.0
    %317 = vmatpush1.msra.mxu0 0.0
    %318 = vmatprep.subr.mxu0 0.0
    %319 = vmatpush1.msra.mxu0 0.0
    %320 = vmatprep.subr.mxu0 0.0
    %321 = vmatpush1.msra.mxu0 0.0
    %322 = vmatprep.subr.mxu0 0.0
    %323 = vmatpush1.msra.mxu0 0.0
    %324 = vmatprep.subr.mxu0 0.0
    %325 = vmatpush1.msra.mxu0 0.0
    %326 = vmatprep.subr.mxu0 0.0
    %327 = vmatpush1.msra.mxu0 0.0
    %328 = vmatprep.subr.mxu0 0.0
    %329 = vmatpush1.msra.mxu0 0.0
    %330 = vmatprep.subr.mxu0 0.0
    %331 = vmatpush1.msra.mxu0 0.0
    %332 = vmatprep.subr.mxu0 0.0
    %333 = vmatpush1.msra.mxu0 0.0
    %334 = vmatprep.subr.mxu0 0.0
    %335 = vmatpush1.msra.mxu0 0.0
    %336 = vmatprep.subr.mxu0 0.0
    %337 = vmatpush1.msra.mxu0 0.0
    %338 = vmatprep.subr.mxu0 0.0
    %339 = vmatpush1.msra.mxu0 0.0
    %340 = vmatprep.subr.mxu0 0.0
    %341 = vmatpush1.msra.mxu0 0.0
    %342 = vmatprep.subr.mxu0 0.0
    %343 = vmatpush1.msra.mxu0 0.0
    %344 = vmatprep.subr.mxu0 0.0
    %345 = vmatpush1.msra.mxu0 0.0
    %346 = vmatprep.subr.mxu0 0.0
    %347 = vmatpush1.msra.mxu0 0.0
    %348 = vmatprep.subr.mxu0 0.0
    %349 = vmatpush1.msra.mxu0 0.0
    %350 = vmatprep.subr.mxu0 0.0
    %351 = vmatpush1.msra.mxu0 0.0
    %352 = vmatprep.subr.mxu0 0.0
    %353 = vmatpush1.msra.mxu0 0.0
    %354 = vmatprep.subr.mxu0 0.0
    %355 = vmatpush1.msra.mxu0 0.0
    %356 = vmatprep.subr.mxu0 0.0
    %357 = vmatpush1.msra.mxu0 0.0
    %358 = vmatprep.subr.mxu0 0.0
    %359 = vmatpush1.msra.mxu0 0.0
    %360 = vmatprep.subr.mxu0 0.0
    %361 = vmatpush1.msra.mxu0 0.0
    %362 = vmatprep.subr.mxu0 0.0
    %363 = vmatpush1.msra.mxu0 0.0
    %364 = vmatprep.subr.mxu0 0.0
    %365 = vmatpush1.msra.mxu0 0.0
    %366 = vmatprep.subr.mxu0 0.0
    %367 = vmatpush1.msra.mxu0 0.0
    %368 = vmatprep.subr.mxu0 0.0
    %369 = vmatpush1.msra.mxu0 0.0
    %370 = vmatprep.mubr.f32.mxu0 0.0
    %371 = vmatmul.mubr.f32.gmra.mrb[0].mxu0 %v304
    %v372 = vpop.f32.mrb[0].mxu0
    %v373 = vadd.f32 %v251, %v372
    %v374 = vpop.f32.mrb[0].mxu0
    %375 = vdwg.mxu0
    %v376 = vadd.f32 %v147, %v373
    %v377 = vxor.u32 %v376, 2147483648
    %v378 = vmul.f32 %v377, 1.442695
    %v379 = vpow.pop %v378
    %v380 = vadd.f32 %v379, 1.0
    %v381 = vrcp.pop %v380
    %v382 = vmul.f32 1.0, %v381
    %384 = vrot.lane.b32.xlu0 %v373, 64
    %v385 = vpop.permute.xlu0 %384
    %v387 = vmul.f32 %v382, %v385
    %389 = vrot.lane.b32.xlu0 %v387, 64
    %v390 = vpop.permute.xlu0 %389
    %v392 = vadd.f32 %v147, %v390
    %v393 = vtanh.pop %v392
    %v394 = vsub.f32 1.0, %v382
    %396 = vrot.lane.b32.xlu0 %v393, 96
    %v397 = vpop.permute.xlu0 %396
    %v399 = vmul.f32 %v394, %v397
    %400 = vrot.lane.b32.xlu0 %v302, 32
    %v401 = vpop.permute.xlu0 %400
    %v403 = vmul.f32 %v382, %v401
    %v404 = vadd.f32 %v399, %v403
    %406 = vrot.lane.b32.xlu0 %v404, 96
    %v407 = vpop.permute.xlu0 %406
    %v408 = vsel %vm76, %v407, 0
    %410 = vmatprep.subr.mxu0 0.0
    %411 = vmatpush1.msra.mxu0 %v242
    %412 = vmatprep.subr.mxu0 0.0
    %413 = vmatpush1.msra.mxu0 %v243
    %414 = vmatprep.subr.mxu0 0.0
    %415 = vmatpush1.msra.mxu0 %v244
    %416 = vmatprep.subr.mxu0 0.0
    %417 = vmatpush1.msra.mxu0 %v245
    %418 = vmatprep.subr.mxu0 0.0
    %419 = vmatpush1.msra.mxu0 0.0
    %420 = vmatprep.subr.mxu0 0.0
    %421 = vmatpush1.msra.mxu0 0.0
    %422 = vmatprep.subr.mxu0 0.0
    %423 = vmatpush1.msra.mxu0 0.0
    %424 = vmatprep.subr.mxu0 0.0
    %425 = vmatpush1.msra.mxu0 0.0
    %426 = vmatprep.subr.mxu0 0.0
    %427 = vmatpush1.msra.mxu0 0.0
    %428 = vmatprep.subr.mxu0 0.0
    %429 = vmatpush1.msra.mxu0 0.0
    %430 = vmatprep.subr.mxu0 0.0
    %431 = vmatpush1.msra.mxu0 0.0
    %432 = vmatprep.subr.mxu0 0.0
    %433 = vmatpush1.msra.mxu0 0.0
    %434 = vmatprep.subr.mxu0 0.0
    %435 = vmatpush1.msra.mxu0 0.0
    %436 = vmatprep.subr.mxu0 0.0
    %437 = vmatpush1.msra.mxu0 0.0
    %438 = vmatprep.subr.mxu0 0.0
    %439 = vmatpush1.msra.mxu0 0.0
    %440 = vmatprep.subr.mxu0 0.0
    %441 = vmatpush1.msra.mxu0 0.0
    %442 = vmatprep.subr.mxu0 0.0
    %443 = vmatpush1.msra.mxu0 0.0
    %444 = vmatprep.subr.mxu0 0.0
    %445 = vmatpush1.msra.mxu0 0.0
    %446 = vmatprep.subr.mxu0 0.0
    %447 = vmatpush1.msra.mxu0 0.0
    %448 = vmatprep.subr.mxu0 0.0
    %449 = vmatpush1.msra.mxu0 0.0
    %450 = vmatprep.subr.mxu0 0.0
    %451 = vmatpush1.msra.mxu0 0.0
    %452 = vmatprep.subr.mxu0 0.0
    %453 = vmatpush1.msra.mxu0 0.0
    %454 = vmatprep.subr.mxu0 0.0
    %455 = vmatpush1.msra.mxu0 0.0
    %456 = vmatprep.subr.mxu0 0.0
    %457 = vmatpush1.msra.mxu0 0.0
    %458 = vmatprep.subr.mxu0 0.0
    %459 = vmatpush1.msra.mxu0 0.0
    %460 = vmatprep.subr.mxu0 0.0
    %461 = vmatpush1.msra.mxu0 0.0
    %462 = vmatprep.subr.mxu0 0.0
    %463 = vmatpush1.msra.mxu0 0.0
    %464 = vmatprep.subr.mxu0 0.0
    %465 = vmatpush1.msra.mxu0 0.0
    %466 = vmatprep.subr.mxu0 0.0
    %467 = vmatpush1.msra.mxu0 0.0
    %468 = vmatprep.subr.mxu0 0.0
    %469 = vmatpush1.msra.mxu0 0.0
    %470 = vmatprep.subr.mxu0 0.0
    %471 = vmatpush1.msra.mxu0 0.0
    %472 = vmatprep.subr.mxu0 0.0
    %473 = vmatpush1.msra.mxu0 0.0
    %474 = vmatprep.mubr.f32.mxu0 0.0
    %475 = vmatmul.mubr.f32.gmra.mrb[0].mxu0 %v408
    %v476 = vpop.f32.mrb[0].mxu0
    %v477 = vadd.f32 %v251, %v476
    %v478 = vpop.f32.mrb[0].mxu0
    %479 = vdwg.mxu0
    %v482 = vunpack.c.l.s4 1966171168
    %v483 = vunpack.c.0.s8 %v482
    %v484 = vlaneseq
    %v485 = vshrl.u32 %v484, 7
    %v486 = vsub.s32 %v483, %v485
    %v487 = vrot.slane %v477, %v486
    %v488 = vcombine.high %v487, %v487
    %v490 = vunpack.c.l.s4 1966171168
    %v491 = vunpack.c.0.s8 %v490
    %v492 = vlaneseq
    %v493 = vshrl.u32 %v492, 7
    %v494 = vsub.s32 %v491, %v493
    %v495 = vrot.slane %v487, %v494
    %v497 = vunpack.c.l.s4 1966171168
    %v498 = vunpack.c.0.s8 %v497
    %v499 = vlaneseq
    %v500 = vshrl.u32 %v499, 7
    %v501 = vsub.s32 %v498, %v500
    %v502 = vrot.slane %v488, %v501
    %v503 = vlaneseq
    %v504 = vshrl.u32 %v503, 7
    %v505 = vsub.s32 0, %v504
    %v506 = vrot.slane %v495, %v505
    %v507 = vlaneseq
    %v508 = vshrl.u32 %v507, 7
    %v509 = vsub.s32 0, %v508
    %v510 = vrot.slane %v502, %v509
    %515 = vrot.lane.b32.xlu0 %v234, 96
    %v516 = vpop.permute.xlu0 %515
    %517 = vrot.lane.b32.xlu0 %v239, 96
    %v518 = vpop.permute.xlu0 %517
    %v521 = vadd.f32 %v506, %v516
    %v522 = vadd.f32 %v510, %v518
    %v523 = vtanh.pop %v521
    %v524 = vtanh.pop %v522
    %v526 = vlaneseq
    %v527 = vshrl.u32 %v526, 7
    %v528 = vsub.s32 0, %v527
    %v529 = vrot.slane %v264, %v528
    %530 = vrot.lane.b32.xlu0 %v529, 96
    %v531 = vpop.permute.xlu0 %530
    %v533 = vmul.f32 %v523, %v531
    %v534 = vmul.f32 %v524, %v531
    %537 = vrot.lane.b32.xlu0 %v533, 32
    %v538 = vpop.permute.xlu0 %537
    %539 = vrot.lane.b32.xlu0 %v534, 32
    %v540 = vpop.permute.xlu0 %539
    %v543 = vsel %vm76, %v538, 0.0
    %544 = vadd.xlane.f32.xlu0 %v543
    %v545 = vpop.xlane.xlu0 %544
    %v546 = vsel %vm76, %v540, 0.0
    %547 = vadd.xlane.f32.xlu0 %v546
    %v548 = vpop.xlane.xlu0 %547
    %v551 = vlaneseq
    %v552 = vshrl.u32 %v551, 7
    %v553 = vsub.s32 %v301, %v552
    %v554 = vrot.slane %v545, %v553
    %v555 = vlaneseq
    %v556 = vshrl.u32 %v555, 7
    %v557 = vsub.s32 %v301, %v556
    %v558 = vrot.slane %v548, %v557
    %vm559 = vcmask 1041409
    %v560 = vsel %vm559, %v558, %v554
    %vm562 = vcmask 58368
    %v563 = vsel %vm562, %v560, -inf
    %564 = vmax.xlane.f32.xlu0 %v563
    %v565 = vpop.xlane.xlu0 %564
    %v567 = vlaneseq
    %v568 = vshrl.u32 %v567, 7
    %v569 = vsub.s32 0, %v568
    %v570 = vrot.slane %v565, %v569
    %v571 = vlaneseq
    %v572 = vshrl.u32 %v571, 7
    %v573 = vsub.s32 1, %v572
    %v574 = vrot.slane %v565, %v573
    %vm577 = vcmp.eq.f32.partialorder %v545, %v570
    %vm578 = vcmp.eq.f32.partialorder %v548, %v574
    %580 = vbcast.lane.b32.xlu0 %v301, 256
    %v581 = vpop.permute.xlu0 %580
    %v582 = vsel %vm577, %v581, 8
    %v583 = vsel %vm578, %v581, 8
    %584 = vset.pattern.permute.xlu0 0
    %585 = vperm.xlu0 %584, %v582
    %v586 = vpop.permute.xlu0 %585
    %587 = vset.pattern.permute.xlu0 0
    %588 = vperm.xlu0 %587, %v583
    %v589 = vpop.permute.xlu0 %588
    %v590 = vlaneseq
    %v591 = vshrl.u32 %v590, 7
    %v592 = vsub.s32 %v301, %v591
    %v593 = vrot.slane %v586, %v592
    %v594 = vlaneseq
    %v595 = vshrl.u32 %v594, 7
    %v596 = vsub.s32 %v301, %v595
    %v597 = vrot.slane %v589, %v596
    %v598 = vsel %vm559, %v597, %v593
    %v599 = vsel %vm562, %v598, 2147483647
    %v600 = vand.u32 %v599, 65535
    %v601 = vshra.s32 %v599, 16
    %v602 = vcvt.s32.f32 %v600
    %v603 = vcvt.s32.f32 %v601
    %604 = vmin.xlane.f32.xlu0 %v603
    %v605 = vpop.xlane.xlu0 %604
    %vm606 = vcmp.eq.f32.partialorder %v603, %v605
    %v607 = vsel %vm606, %v602, inf
    %608 = vmin.xlane.f32.xlu0 %v607
    %v609 = vpop.xlane.xlu0 %608
    %v610 = vcvt.f32.s32 %v609
    %v611 = vcvt.f32.s32 %v605
    %v612 = vshll.u32 %v611, 16
    %v613 = vadd.s32 %v612, %v610
    %vm614 = vcmp.eq.s32.totalorder %v301, %v613
    %v615 = vsel %vm614, 1, 0
    %v616 = vcvt.s32.f32 %v615
    %v617 = vlaneseq
    %v618 = vshrl.u32 %v617, 7
    %v619 = vsub.s32 0, %v618
    %v620 = vrot.slane %v616, %v619
    %622 = vbcast.lane.b32.xlu0 %v620, 256
    %v623 = vpop.permute.xlu0 %622
    %v624 = vlaneseq
    %v625 = vshrl.u32 %v624, 7
    %v626 = vsub.s32 1, %v625
    %v627 = vrot.slane %v616, %v626
    %629 = vbcast.lane.b32.xlu0 %v627, 256
    %v630 = vpop.permute.xlu0 %629
    %v631 = vmul.f32 %v62, %v623
    %v632 = vmul.f32 %v63, %v630
    %v633 = vsel %vm76, %v631, 0.0
    %v634 = vrot.slane %v633, 4
    %v635 = vadd.f32 %v633, %v634
    %v636 = vrot.slane %v635, 2
    %v637 = vadd.f32 %v635, %v636
    %v638 = vrot.slane %v637, 1
    %v639 = vadd.f32 %v637, %v638
    %v640 = vsel %vm76, %v632, 0.0
    %v641 = vrot.slane %v640, 4
    %v642 = vadd.f32 %v640, %v641
    %v643 = vrot.slane %v642, 2
    %v644 = vadd.f32 %v642, %v643
    %v645 = vrot.slane %v644, 1
    %v646 = vadd.f32 %v644, %v645
    %v649 = vsel %vm559, %v646, %v639
    %v651 = vsel %vm76, %v649, %v404
    %vm652 = vcmask 523264
    %v654 = vsel %vm652, %v651, 0
    %656 = vmatprep.subr.mxu0 0.0
    %657 = vmatpush1.msra.mxu0 %v266
    %658 = vmatprep.subr.mxu0 0.0
    %659 = vmatpush1.msra.mxu0 %v267
    %660 = vmatprep.subr.mxu0 0.0
    %661 = vmatpush1.msra.mxu0 %v268
    %662 = vmatprep.subr.mxu0 0.0
    %663 = vmatpush1.msra.mxu0 %v269
    %664 = vmatprep.subr.mxu0 0.0
    %665 = vmatpush1.msra.mxu0 %v270
    %666 = vmatprep.subr.mxu0 0.0
    %667 = vmatpush1.msra.mxu0 %v271
    %668 = vmatprep.subr.mxu0 0.0
    %669 = vmatpush1.msra.mxu0 %v272
    %670 = vmatprep.subr.mxu0 0.0
    %671 = vmatpush1.msra.mxu0 %v273
    %672 = vmatprep.subr.mxu0 0.0
    %673 = vmatpush1.msra.mxu0 0.0
    %674 = vmatprep.subr.mxu0 0.0
    %675 = vmatpush1.msra.mxu0 0.0
    %676 = vmatprep.subr.mxu0 0.0
    %677 = vmatpush1.msra.mxu0 0.0
    %678 = vmatprep.subr.mxu0 0.0
    %679 = vmatpush1.msra.mxu0 0.0
    %680 = vmatprep.subr.mxu0 0.0
    %681 = vmatpush1.msra.mxu0 0.0
    %682 = vmatprep.subr.mxu0 0.0
    %683 = vmatpush1.msra.mxu0 0.0
    %684 = vmatprep.subr.mxu0 0.0
    %685 = vmatpush1.msra.mxu0 0.0
    %686 = vmatprep.subr.mxu0 0.0
    %687 = vmatpush1.msra.mxu0 0.0
    %688 = vmatprep.subr.mxu0 0.0
    %689 = vmatpush1.msra.mxu0 0.0
    %690 = vmatprep.subr.mxu0 0.0
    %691 = vmatpush1.msra.mxu0 0.0
    %692 = vmatprep.subr.mxu0 0.0
    %693 = vmatpush1.msra.mxu0 0.0
    %694 = vmatprep.subr.mxu0 0.0
    %695 = vmatpush1.msra.mxu0 0.0
    %696 = vmatprep.subr.mxu0 0.0
    %697 = vmatpush1.msra.mxu0 0.0
    %698 = vmatprep.subr.mxu0 0.0
    %699 = vmatpush1.msra.mxu0 0.0
    %700 = vmatprep.subr.mxu0 0.0
    %701 = vmatpush1.msra.mxu0 0.0
    %702 = vmatprep.subr.mxu0 0.0
    %703 = vmatpush1.msra.mxu0 0.0
    %704 = vmatprep.subr.mxu0 0.0
    %705 = vmatpush1.msra.mxu0 0.0
    %706 = vmatprep.subr.mxu0 0.0
    %707 = vmatpush1.msra.mxu0 0.0
    %708 = vmatprep.subr.mxu0 0.0
    %709 = vmatpush1.msra.mxu0 0.0
    %710 = vmatprep.subr.mxu0 0.0
    %711 = vmatpush1.msra.mxu0 0.0
    %712 = vmatprep.subr.mxu0 0.0
    %713 = vmatpush1.msra.mxu0 0.0
    %714 = vmatprep.subr.mxu0 0.0
    %715 = vmatpush1.msra.mxu0 0.0
    %716 = vmatprep.subr.mxu0 0.0
    %717 = vmatpush1.msra.mxu0 0.0
    %718 = vmatprep.subr.mxu0 0.0
    %719 = vmatpush1.msra.mxu0 0.0
    %720 = vmatprep.mubr.f32.mxu0 0.0
    %721 = vmatmul.mubr.f32.gmra.mrb[0].mxu0 %v654
    %v722 = vpop.f32.mrb[0].mxu0
    %v723 = vadd.f32 %v279, %v722
    %v724 = vpop.f32.mrb[0].mxu0
    %725 = vdwg.mxu0
    %v727 = vsel %vm76, %v723, 0
    %729 = vmatprep.subr.mxu0 0.0
    %730 = vmatpush1.msra.mxu0 %v253
    %731 = vmatprep.subr.mxu0 0.0
    %732 = vmatpush1.msra.mxu0 %v254
    %733 = vmatprep.subr.mxu0 0.0
    %734 = vmatpush1.msra.mxu0 %v255
    %735 = vmatprep.subr.mxu0 0.0
    %736 = vmatpush1.msra.mxu0 %v256
    %737 = vmatprep.subr.mxu0 0.0
    %738 = vmatpush1.msra.mxu0 0.0
    %739 = vmatprep.subr.mxu0 0.0
    %740 = vmatpush1.msra.mxu0 0.0
    %741 = vmatprep.subr.mxu0 0.0
    %742 = vmatpush1.msra.mxu0 0.0
    %743 = vmatprep.subr.mxu0 0.0
    %744 = vmatpush1.msra.mxu0 0.0
    %745 = vmatprep.subr.mxu0 0.0
    %746 = vmatpush1.msra.mxu0 0.0
    %747 = vmatprep.subr.mxu0 0.0
    %748 = vmatpush1.msra.mxu0 0.0
    %749 = vmatprep.subr.mxu0 0.0
    %750 = vmatpush1.msra.mxu0 0.0
    %751 = vmatprep.subr.mxu0 0.0
    %752 = vmatpush1.msra.mxu0 0.0
    %753 = vmatprep.subr.mxu0 0.0
    %754 = vmatpush1.msra.mxu0 0.0
    %755 = vmatprep.subr.mxu0 0.0
    %756 = vmatpush1.msra.mxu0 0.0
    %757 = vmatprep.subr.mxu0 0.0
    %758 = vmatpush1.msra.mxu0 0.0
    %759 = vmatprep.subr.mxu0 0.0
    %760 = vmatpush1.msra.mxu0 0.0
    %761 = vmatprep.subr.mxu0 0.0
    %762 = vmatpush1.msra.mxu0 0.0
    %763 = vmatprep.subr.mxu0 0.0
    %764 = vmatpush1.msra.mxu0 0.0
    %765 = vmatprep.subr.mxu0 0.0
    %766 = vmatpush1.msra.mxu0 0.0
    %767 = vmatprep.subr.mxu0 0.0
    %768 = vmatpush1.msra.mxu0 0.0
    %769 = vmatprep.subr.mxu0 0.0
    %770 = vmatpush1.msra.mxu0 0.0
    %771 = vmatprep.subr.mxu0 0.0
    %772 = vmatpush1.msra.mxu0 0.0
    %773 = vmatprep.subr.mxu0 0.0
    %774 = vmatpush1.msra.mxu0 0.0
    %775 = vmatprep.subr.mxu0 0.0
    %776 = vmatpush1.msra.mxu0 0.0
    %777 = vmatprep.subr.mxu0 0.0
    %778 = vmatpush1.msra.mxu0 0.0
    %779 = vmatprep.subr.mxu0 0.0
    %780 = vmatpush1.msra.mxu0 0.0
    %781 = vmatprep.subr.mxu0 0.0
    %782 = vmatpush1.msra.mxu0 0.0
    %783 = vmatprep.subr.mxu0 0.0
    %784 = vmatpush1.msra.mxu0 0.0
    %785 = vmatprep.subr.mxu0 0.0
    %786 = vmatpush1.msra.mxu0 0.0
    %787 = vmatprep.subr.mxu0 0.0
    %788 = vmatpush1.msra.mxu0 0.0
    %789 = vmatprep.subr.mxu0 0.0
    %790 = vmatpush1.msra.mxu0 0.0
    %791 = vmatprep.subr.mxu0 0.0
    %792 = vmatpush1.msra.mxu0 0.0
    %793 = vmatprep.mubr.f32.mxu0 0.0
    %794 = vmatmul.mubr.f32.gmra.mrb[0].mxu0 %v727
    %v795 = vpop.f32.mrb[0].mxu0
    %v796 = vadd.f32 %v262, %v795
    %v797 = vpop.f32.mrb[0].mxu0
    %798 = vdwg.mxu0
    %v801 = vunpack.c.l.s4 1966171168
    %v802 = vunpack.c.0.s8 %v801
    %v803 = vlaneseq
    %v804 = vshrl.u32 %v803, 7
    %v805 = vsub.s32 %v802, %v804
    %v806 = vrot.slane %v796, %v805
    %v807 = vcombine.high %v806, %v806
    %v809 = vunpack.c.l.s4 1966171168
    %v810 = vunpack.c.0.s8 %v809
    %v811 = vlaneseq
    %v812 = vshrl.u32 %v811, 7
    %v813 = vsub.s32 %v810, %v812
    %v814 = vrot.slane %v806, %v813
    %v816 = vunpack.c.l.s4 1966171168
    %v817 = vunpack.c.0.s8 %v816
    %v818 = vlaneseq
    %v819 = vshrl.u32 %v818, 7
    %v820 = vsub.s32 %v817, %v819
    %v821 = vrot.slane %v807, %v820
    %v822 = vlaneseq
    %v823 = vshrl.u32 %v822, 7
    %v824 = vsub.s32 0, %v823
    %v825 = vrot.slane %v814, %v824
    %v826 = vlaneseq
    %v827 = vshrl.u32 %v826, 7
    %v828 = vsub.s32 0, %v827
    %v829 = vrot.slane %v821, %v828
    %v832 = vadd.f32 %v825, %v516
    %v833 = vadd.f32 %v829, %v518
    %v834 = vtanh.pop %v832
    %v835 = vtanh.pop %v833
    %v837 = vlaneseq
    %v838 = vshrl.u32 %v837, 7
    %v839 = vsub.s32 0, %v838
    %v840 = vrot.slane %v265, %v839
    %v842 = vmul.f32 %v834, %v840
    %v843 = vmul.f32 %v835, %v840
    %v844 = vsel %vm76, %v842, 0.0
    %845 = vadd.xlane.f32.xlu0 %v844
    %v846 = vpop.xlane.xlu0 %845
    %v847 = vsel %vm76, %v843, 0.0
    %848 = vadd.xlane.f32.xlu0 %v847
    %v849 = vpop.xlane.xlu0 %848
    %v852 = vlaneseq
    %v853 = vshrl.u32 %v852, 7
    %v854 = vsub.s32 %v301, %v853
    %v855 = vrot.slane %v846, %v854
    %v856 = vlaneseq
    %v857 = vshrl.u32 %v856, 7
    %v858 = vsub.s32 %v301, %v857
    %v859 = vrot.slane %v849, %v858
    %v860 = vsel %vm559, %v859, %v855
    %v862 = vsel %vm562, %v860, -inf
    %863 = vmax.xlane.f32.xlu0 %v862
    %v864 = vpop.xlane.xlu0 %863
    %v866 = vlaneseq
    %v867 = vshrl.u32 %v866, 7
    %v868 = vsub.s32 0, %v867
    %v869 = vrot.slane %v864, %v868
    %v870 = vlaneseq
    %v871 = vshrl.u32 %v870, 7
    %v872 = vsub.s32 1, %v871
    %v873 = vrot.slane %v864, %v872
    %vm876 = vcmp.eq.f32.partialorder %v846, %v869
    %vm877 = vcmp.eq.f32.partialorder %v849, %v873
    %v878 = vsel %vm876, %v581, 8
    %v879 = vsel %vm877, %v581, 8
    %880 = vset.pattern.permute.xlu0 0
    %881 = vperm.xlu0 %880, %v878
    %v882 = vpop.permute.xlu0 %881
    %883 = vset.pattern.permute.xlu0 0
    %884 = vperm.xlu0 %883, %v879
    %v885 = vpop.permute.xlu0 %884
    %v886 = vlaneseq
    %v887 = vshrl.u32 %v886, 7
    %v888 = vsub.s32 %v301, %v887
    %v889 = vrot.slane %v882, %v888
    %v890 = vlaneseq
    %v891 = vshrl.u32 %v890, 7
    %v892 = vsub.s32 %v301, %v891
    %v893 = vrot.slane %v885, %v892
    %v894 = vsel %vm559, %v893, %v889
    %v895 = vsel %vm562, %v894, 2147483647
    %v896 = vand.u32 %v895, 65535
    %v897 = vshra.s32 %v895, 16
    %v898 = vcvt.s32.f32 %v896
    %v899 = vcvt.s32.f32 %v897
    %900 = vmin.xlane.f32.xlu0 %v899
    %v901 = vpop.xlane.xlu0 %900
    %vm902 = vcmp.eq.f32.partialorder %v899, %v901
    %v903 = vsel %vm902, %v898, inf
    %904 = vmin.xlane.f32.xlu0 %v903
    %v905 = vpop.xlane.xlu0 %904
    %v906 = vcvt.f32.s32 %v905
    %v907 = vcvt.f32.s32 %v901
    %v908 = vshll.u32 %v907, 16
    %v909 = vadd.s32 %v908, %v906
    %vm910 = vcmp.eq.s32.totalorder %v301, %v909
    %v911 = vsel %vm910, 1, 0
    %v912 = vcvt.s32.f32 %v911
    %v913 = vlaneseq
    %v914 = vshrl.u32 %v913, 7
    %v915 = vsub.s32 0, %v914
    %v916 = vrot.slane %v912, %v915
    %918 = vbcast.lane.b32.xlu0 %v916, 256
    %v919 = vpop.permute.xlu0 %918
    %v920 = vlaneseq
    %v921 = vshrl.u32 %v920, 7
    %v922 = vsub.s32 1, %v921
    %v923 = vrot.slane %v912, %v922
    %925 = vbcast.lane.b32.xlu0 %v923, 256
    %v926 = vpop.permute.xlu0 %925
    %v927 = vmul.f32 %v62, %v919
    %v928 = vmul.f32 %v63, %v926
    %v929 = vsel %vm76, %v927, 0.0
    %v930 = vrot.slane %v929, 4
    %v931 = vadd.f32 %v929, %v930
    %v932 = vrot.slane %v931, 2
    %v933 = vadd.f32 %v931, %v932
    %v934 = vrot.slane %v933, 1
    %v935 = vadd.f32 %v933, %v934
    %v936 = vsel %vm76, %v928, 0.0
    %v937 = vrot.slane %v936, 4
    %v938 = vadd.f32 %v936, %v937
    %v939 = vrot.slane %v938, 2
    %v940 = vadd.f32 %v938, %v939
    %v941 = vrot.slane %v940, 1
    %v942 = vadd.f32 %v940, %v941
    %v945 = vsel %vm559, %v942, %v935
    %947 = vrot.lane.b32.xlu0 %v649, 32
    %v948 = vpop.permute.xlu0 %947
    %950 = vrot.lane.b32.xlu0 %v404, 32
    %v951 = vpop.permute.xlu0 %950
    %v953 = vsel %vm76, %v945, %v948
    %v954 = vsel %vm652, %v953, %v951
    %vm955 = vcmask 785408
    %v957 = vsel %vm955, %v954, 0
    %959 = vmatprep.subr.mxu0 0.0
    %960 = vmatpush1.msra.mxu0 %v281
    %961 = vmatprep.subr.mxu0 0.0
    %962 = vmatpush1.msra.mxu0 %v282
    %963 = vmatprep.subr.mxu0 0.0
    %964 = vmatpush1.msra.mxu0 %v283
    %965 = vmatprep.subr.mxu0 0.0
    %966 = vmatpush1.msra.mxu0 %v284
    %967 = vmatprep.subr.mxu0 0.0
    %968 = vmatpush1.msra.mxu0 %v285
    %969 = vmatprep.subr.mxu0 0.0
    %970 = vmatpush1.msra.mxu0 %v286
    %971 = vmatprep.subr.mxu0 0.0
    %972 = vmatpush1.msra.mxu0 %v287
    %973 = vmatprep.subr.mxu0 0.0
    %974 = vmatpush1.msra.mxu0 %v288
    %975 = vmatprep.subr.mxu0 0.0
    %976 = vmatpush1.msra.mxu0 %v289
    %977 = vmatprep.subr.mxu0 0.0
    %978 = vmatpush1.msra.mxu0 %v290
    %979 = vmatprep.subr.mxu0 0.0
    %980 = vmatpush1.msra.mxu0 %v291
    %981 = vmatprep.subr.mxu0 0.0
    %982 = vmatpush1.msra.mxu0 %v292
    %983 = vmatprep.subr.mxu0 0.0
    %984 = vmatpush1.msra.mxu0 0.0
    %985 = vmatprep.subr.mxu0 0.0
    %986 = vmatpush1.msra.mxu0 0.0
    %987 = vmatprep.subr.mxu0 0.0
    %988 = vmatpush1.msra.mxu0 0.0
    %989 = vmatprep.subr.mxu0 0.0
    %990 = vmatpush1.msra.mxu0 0.0
    %991 = vmatprep.subr.mxu0 0.0
    %992 = vmatpush1.msra.mxu0 0.0
    %993 = vmatprep.subr.mxu0 0.0
    %994 = vmatpush1.msra.mxu0 0.0
    %995 = vmatprep.subr.mxu0 0.0
    %996 = vmatpush1.msra.mxu0 0.0
    %997 = vmatprep.subr.mxu0 0.0
    %998 = vmatpush1.msra.mxu0 0.0
    %999 = vmatprep.subr.mxu0 0.0
    %1000 = vmatpush1.msra.mxu0 0.0
    %1001 = vmatprep.subr.mxu0 0.0
    %1002 = vmatpush1.msra.mxu0 0.0
    %1003 = vmatprep.subr.mxu0 0.0
    %1004 = vmatpush1.msra.mxu0 0.0
    %1005 = vmatprep.subr.mxu0 0.0
    %1006 = vmatpush1.msra.mxu0 0.0
    %1007 = vmatprep.subr.mxu0 0.0
    %1008 = vmatpush1.msra.mxu0 0.0
    %1009 = vmatprep.subr.mxu0 0.0
    %1010 = vmatpush1.msra.mxu0 0.0
    %1011 = vmatprep.subr.mxu0 0.0
    %1012 = vmatpush1.msra.mxu0 0.0
    %1013 = vmatprep.subr.mxu0 0.0
    %1014 = vmatpush1.msra.mxu0 0.0
    %1015 = vmatprep.subr.mxu0 0.0
    %1016 = vmatpush1.msra.mxu0 0.0
    %1017 = vmatprep.subr.mxu0 0.0
    %1018 = vmatpush1.msra.mxu0 0.0
    %1019 = vmatprep.subr.mxu0 0.0
    %1020 = vmatpush1.msra.mxu0 0.0
    %1021 = vmatprep.subr.mxu0 0.0
    %1022 = vmatpush1.msra.mxu0 0.0
    %1023 = vmatprep.mubr.f32.mxu0 0.0
    %1024 = vmatmul.mubr.f32.gmra.mrb[0].mxu0 %v957
    %v1025 = vpop.f32.mrb[0].mxu0
    %v1026 = vadd.f32 %v298, %v1025
    %v1027 = vpop.f32.mrb[0].mxu0
    %1028 = vdwg.mxu0
    %1029 = vst.msk [vmem:[%s17] sm:$0x3] %vm562, %v860
    %1030 = vst.msk [vmem:[%s18] sm:$0x3] %vm562, %v560
    %vm1031 = vcmask 25600
    %1032 = vst.msk [vmem:[#allocation2] sm:$0x3] %vm1031, %v1026
    %v1033 = vadd.f32 %v147, %v477
    %v1034 = vxor.u32 %v1033, 2147483648
    %v1035 = vmul.f32 %v1034, 1.442695
    %v1036 = vpow.pop %v1035
    %v1037 = vadd.f32 %v1036, 1.0
    %v1038 = vrcp.pop %v1037
    %v1039 = vmul.f32 1.0, %v1038
    %1040 = vrot.lane.b32.xlu0 %v477, 64
    %v1041 = vpop.permute.xlu0 %1040
    %v1043 = vmul.f32 %v1039, %v1041
    %1045 = vrot.lane.b32.xlu0 %v1043, 64
    %v1046 = vpop.permute.xlu0 %1045
    %v1048 = vadd.f32 %v147, %v1046
    %v1049 = vtanh.pop %v1048
    %v1050 = vsub.f32 1.0, %v1039
    %1052 = vrot.lane.b32.xlu0 %v1049, 96
    %v1053 = vpop.permute.xlu0 %1052
    %v1055 = vmul.f32 %v1050, %v1053
    %v1056 = vmul.f32 %v1039, %v404
    %v1057 = vadd.f32 %v1055, %v1056
    %1059 = vrot.lane.b32.xlu0 %v1057, 96
    %v1060 = vpop.permute.xlu0 %1059
    %v1061 = vsel %vm76, %v1060, 0
    %1063 = vmatprep.subr.mxu0 0.0
    %1064 = vmatpush1.msra.mxu0 %v242
    %1065 = vmatprep.subr.mxu0 0.0
    %1066 = vmatpush1.msra.mxu0 %v243
    %1067 = vmatprep.subr.mxu0 0.0
    %1068 = vmatpush1.msra.mxu0 %v244
    %1069 = vmatprep.subr.mxu0 0.0
    %1070 = vmatpush1.msra.mxu0 %v245
    %1071 = vmatprep.subr.mxu0 0.0
    %1072 = vmatpush1.msra.mxu0 0.0
    %1073 = vmatprep.subr.mxu0 0.0
    %1074 = vmatpush1.msra.mxu0 0.0
    %1075 = vmatprep.subr.mxu0 0.0
    %1076 = vmatpush1.msra.mxu0 0.0
    %1077 = vmatprep.subr.mxu0 0.0
    %1078 = vmatpush1.msra.mxu0 0.0
    %1079 = vmatprep.subr.mxu0 0.0
    %1080 = vmatpush1.msra.mxu0 0.0
    %1081 = vmatprep.subr.mxu0 0.0
    %1082 = vmatpush1.msra.mxu0 0.0
    %1083 = vmatprep.subr.mxu0 0.0
    %1084 = vmatpush1.msra.mxu0 0.0
    %1085 = vmatprep.subr.mxu0 0.0
    %1086 = vmatpush1.msra.mxu0 0.0
    %1087 = vmatprep.subr.mxu0 0.0
    %1088 = vmatpush1.msra.mxu0 0.0
    %1089 = vmatprep.subr.mxu0 0.0
    %1090 = vmatpush1.msra.mxu0 0.0
    %1091 = vmatprep.subr.mxu0 0.0
    %1092 = vmatpush1.msra.mxu0 0.0
    %1093 = vmatprep.subr.mxu0 0.0
    %1094 = vmatpush1.msra.mxu0 0.0
    %1095 = vmatprep.subr.mxu0 0.0
    %1096 = vmatpush1.msra.mxu0 0.0
    %1097 = vmatprep.subr.mxu0 0.0
    %1098 = vmatpush1.msra.mxu0 0.0
    %1099 = vmatprep.subr.mxu0 0.0
    %1100 = vmatpush1.msra.mxu0 0.0
    %1101 = vmatprep.subr.mxu0 0.0
    %1102 = vmatpush1.msra.mxu0 0.0
    %1103 = vmatprep.subr.mxu0 0.0
    %1104 = vmatpush1.msra.mxu0 0.0
    %1105 = vmatprep.subr.mxu0 0.0
    %1106 = vmatpush1.msra.mxu0 0.0
    %1107 = vmatprep.subr.mxu0 0.0
    %1108 = vmatpush1.msra.mxu0 0.0
    %1109 = vmatprep.subr.mxu0 0.0
    %1110 = vmatpush1.msra.mxu0 0.0
    %1111 = vmatprep.subr.mxu0 0.0
    %1112 = vmatpush1.msra.mxu0 0.0
    %1113 = vmatprep.subr.mxu0 0.0
    %1114 = vmatpush1.msra.mxu0 0.0
    %1115 = vmatprep.subr.mxu0 0.0
    %1116 = vmatpush1.msra.mxu0 0.0
    %1117 = vmatprep.subr.mxu0 0.0
    %1118 = vmatpush1.msra.mxu0 0.0
    %1119 = vmatprep.subr.mxu0 0.0
    %1120 = vmatpush1.msra.mxu0 0.0
    %1121 = vmatprep.subr.mxu0 0.0
    %1122 = vmatpush1.msra.mxu0 0.0
    %1123 = vmatprep.subr.mxu0 0.0
    %1124 = vmatpush1.msra.mxu0 0.0
    %1125 = vmatprep.subr.mxu0 0.0
    %1126 = vmatpush1.msra.mxu0 0.0
    %1127 = vmatprep.mubr.f32.mxu0 0.0
    %1128 = vmatmul.mubr.f32.gmra.mrb[0].mxu0 %v1061
    %v1129 = vpop.f32.mrb[0].mxu0
    %v1130 = vadd.f32 %v251, %v1129
    %v1131 = vpop.f32.mrb[0].mxu0
    %1132 = vdwg.mxu0
    %v1135 = vunpack.c.l.s4 1966171168
    %v1136 = vunpack.c.0.s8 %v1135
    %v1137 = vlaneseq
    %v1138 = vshrl.u32 %v1137, 7
    %v1139 = vsub.s32 %v1136, %v1138
    %v1140 = vrot.slane %v1130, %v1139
    %v1141 = vcombine.high %v1140, %v1140
    %v1143 = vunpack.c.l.s4 1966171168
    %v1144 = vunpack.c.0.s8 %v1143
    %v1145 = vlaneseq
    %v1146 = vshrl.u32 %v1145, 7
    %v1147 = vsub.s32 %v1144, %v1146
    %v1148 = vrot.slane %v1140, %v1147
    %v1150 = vunpack.c.l.s4 1966171168
    %v1151 = vunpack.c.0.s8 %v1150
    %v1152 = vlaneseq
    %v1153 = vshrl.u32 %v1152, 7
    %v1154 = vsub.s32 %v1151, %v1153
    %v1155 = vrot.slane %v1141, %v1154
    %v1156 = vlaneseq
    %v1157 = vshrl.u32 %v1156, 7
    %v1158 = vsub.s32 0, %v1157
    %v1159 = vrot.slane %v1148, %v1158
    %v1160 = vlaneseq
    %v1161 = vshrl.u32 %v1160, 7
    %v1162 = vsub.s32 0, %v1161
    %v1163 = vrot.slane %v1155, %v1162
    %v1166 = vadd.f32 %v1159, %v516
    %v1167 = vadd.f32 %v1163, %v518
    %v1168 = vtanh.pop %v1166
    %v1169 = vtanh.pop %v1167
    %v1170 = vmul.f32 %v1168, %v531
    %v1171 = vmul.f32 %v1169, %v531
    %1174 = vrot.lane.b32.xlu0 %v1170, 32
    %v1175 = vpop.permute.xlu0 %1174
    %1176 = vrot.lane.b32.xlu0 %v1171, 32
    %v1177 = vpop.permute.xlu0 %1176
    %v1180 = vsel %vm76, %v1175, 0.0
    %1181 = vadd.xlane.f32.xlu0 %v1180
    %v1182 = vpop.xlane.xlu0 %1181
    %v1183 = vsel %vm76, %v1177, 0.0
    %1184 = vadd.xlane.f32.xlu0 %v1183
    %v1185 = vpop.xlane.xlu0 %1184
    %v1188 = vlaneseq
    %v1189 = vshrl.u32 %v1188, 7
    %v1190 = vsub.s32 %v301, %v1189
    %v1191 = vrot.slane %v1182, %v1190
    %v1192 = vlaneseq
    %v1193 = vshrl.u32 %v1192, 7
    %v1194 = vsub.s32 %v301, %v1193
    %v1195 = vrot.slane %v1185, %v1194
    %v1196 = vsel %vm559, %v1195, %v1191
    %v1198 = vsel %vm562, %v1196, -inf
    %1199 = vmax.xlane.f32.xlu0 %v1198
    %v1200 = vpop.xlane.xlu0 %1199
    %v1202 = vlaneseq
    %v1203 = vshrl.u32 %v1202, 7
    %v1204 = vsub.s32 0, %v1203
    %v1205 = vrot.slane %v1200, %v1204
    %v1206 = vlaneseq
    %v1207 = vshrl.u32 %v1206, 7
    %v1208 = vsub.s32 1, %v1207
    %v1209 = vrot.slane %v1200, %v1208
    %vm1212 = vcmp.eq.f32.partialorder %v1182, %v1205
    %vm1213 = vcmp.eq.f32.partialorder %v1185, %v1209
    %v1214 = vsel %vm1212, %v581, 8
    %v1215 = vsel %vm1213, %v581, 8
    %1216 = vset.pattern.permute.xlu0 0
    %1217 = vperm.xlu0 %1216, %v1214
    %v1218 = vpop.permute.xlu0 %1217
    %1219 = vset.pattern.permute.xlu0 0
    %1220 = vperm.xlu0 %1219, %v1215
    %v1221 = vpop.permute.xlu0 %1220
    %v1222 = vlaneseq
    %v1223 = vshrl.u32 %v1222, 7
    %v1224 = vsub.s32 %v301, %v1223
    %v1225 = vrot.slane %v1218, %v1224
    %v1226 = vlaneseq
    %v1227 = vshrl.u32 %v1226, 7
    %v1228 = vsub.s32 %v301, %v1227
    %v1229 = vrot.slane %v1221, %v1228
    %v1230 = vsel %vm559, %v1229, %v1225
    %v1231 = vsel %vm562, %v1230, 2147483647
    %v1232 = vand.u32 %v1231, 65535
    %v1233 = vshra.s32 %v1231, 16
    %v1234 = vcvt.s32.f32 %v1232
    %v1235 = vcvt.s32.f32 %v1233
    %1236 = vmin.xlane.f32.xlu0 %v1235
    %v1237 = vpop.xlane.xlu0 %1236
    %vm1238 = vcmp.eq.f32.partialorder %v1235, %v1237
    %v1239 = vsel %vm1238, %v1234, inf
    %1240 = vmin.xlane.f32.xlu0 %v1239
    %v1241 = vpop.xlane.xlu0 %1240
    %v1242 = vcvt.f32.s32 %v1241
    %v1243 = vcvt.f32.s32 %v1237
    %v1244 = vshll.u32 %v1243, 16
    %v1245 = vadd.s32 %v1244, %v1242
    %vm1246 = vcmp.eq.s32.totalorder %v301, %v1245
    %v1247 = vsel %vm1246, 1, 0
    %v1248 = vcvt.s32.f32 %v1247
    %v1249 = vlaneseq
    %v1250 = vshrl.u32 %v1249, 7
    %v1251 = vsub.s32 0, %v1250
    %v1252 = vrot.slane %v1248, %v1251
    %1254 = vbcast.lane.b32.xlu0 %v1252, 256
    %v1255 = vpop.permute.xlu0 %1254
    %v1256 = vlaneseq
    %v1257 = vshrl.u32 %v1256, 7
    %v1258 = vsub.s32 1, %v1257
    %v1259 = vrot.slane %v1248, %v1258
    %1261 = vbcast.lane.b32.xlu0 %v1259, 256
    %v1262 = vpop.permute.xlu0 %1261
    %v1263 = vmul.f32 %v62, %v1255
    %v1264 = vmul.f32 %v63, %v1262
    %v1265 = vsel %vm76, %v1263, 0.0
    %v1266 = vrot.slane %v1265, 4
    %v1267 = vadd.f32 %v1265, %v1266
    %v1268 = vrot.slane %v1267, 2
    %v1269 = vadd.f32 %v1267, %v1268
    %v1270 = vrot.slane %v1269, 1
    %v1271 = vadd.f32 %v1269, %v1270
    %v1272 = vsel %vm76, %v1264, 0.0
    %v1273 = vrot.slane %v1272, 4
    %v1274 = vadd.f32 %v1272, %v1273
    %v1275 = vrot.slane %v1274, 2
    %v1276 = vadd.f32 %v1274, %v1275
    %v1277 = vrot.slane %v1276, 1
    %v1278 = vadd.f32 %v1276, %v1277
    %v1281 = vsel %vm559, %v1278, %v1271
    %v1283 = vsel %vm76, %v1281, %v1057
    %v1285 = vsel %vm652, %v1283, 0
    %1287 = vmatprep.subr.mxu0 0.0
    %1288 = vmatpush1.msra.mxu0 %v266
    %1289 = vmatprep.subr.mxu0 0.0
    %1290 = vmatpush1.msra.mxu0 %v267
    %1291 = vmatprep.subr.mxu0 0.0
    %1292 = vmatpush1.msra.mxu0 %v268
    %1293 = vmatprep.subr.mxu0 0.0
    %1294 = vmatpush1.msra.mxu0 %v269
    %1295 = vmatprep.subr.mxu0 0.0
    %1296 = vmatpush1.msra.mxu0 %v270
    %1297 = vmatprep.subr.mxu0 0.0
    %1298 = vmatpush1.msra.mxu0 %v271
    %1299 = vmatprep.subr.mxu0 0.0
    %1300 = vmatpush1.msra.mxu0 %v272
    %1301 = vmatprep.subr.mxu0 0.0
    %1302 = vmatpush1.msra.mxu0 %v273
    %1303 = vmatprep.subr.mxu0 0.0
    %1304 = vmatpush1.msra.mxu0 0.0
    %1305 = vmatprep.subr.mxu0 0.0
    %1306 = vmatpush1.msra.mxu0 0.0
    %1307 = vmatprep.subr.mxu0 0.0
    %1308 = vmatpush1.msra.mxu0 0.0
    %1309 = vmatprep.subr.mxu0 0.0
    %1310 = vmatpush1.msra.mxu0 0.0
    %1311 = vmatprep.subr.mxu0 0.0
    %1312 = vmatpush1.msra.mxu0 0.0
    %1313 = vmatprep.subr.mxu0 0.0
    %1314 = vmatpush1.msra.mxu0 0.0
    %1315 = vmatprep.subr.mxu0 0.0
    %1316 = vmatpush1.msra.mxu0 0.0
    %1317 = vmatprep.subr.mxu0 0.0
    %1318 = vmatpush1.msra.mxu0 0.0
    %1319 = vmatprep.subr.mxu0 0.0
    %1320 = vmatpush1.msra.mxu0 0.0
    %1321 = vmatprep.subr.mxu0 0.0
    %1322 = vmatpush1.msra.mxu0 0.0
    %1323 = vmatprep.subr.mxu0 0.0
    %1324 = vmatpush1.msra.mxu0 0.0
    %1325 = vmatprep.subr.mxu0 0.0
    %1326 = vmatpush1.msra.mxu0 0.0
    %1327 = vmatprep.subr.mxu0 0.0
    %1328 = vmatpush1.msra.mxu0 0.0
    %1329 = vmatprep.subr.mxu0 0.0
    %1330 = vmatpush1.msra.mxu0 0.0
    %1331 = vmatprep.subr.mxu0 0.0
    %1332 = vmatpush1.msra.mxu0 0.0
    %1333 = vmatprep.subr.mxu0 0.0
    %1334 = vmatpush1.msra.mxu0 0.0
    %1335 = vmatprep.subr.mxu0 0.0
    %1336 = vmatpush1.msra.mxu0 0.0
    %1337 = vmatprep.subr.mxu0 0.0
    %1338 = vmatpush1.msra.mxu0 0.0
    %1339 = vmatprep.subr.mxu0 0.0
    %1340 = vmatpush1.msra.mxu0 0.0
    %1341 = vmatprep.subr.mxu0 0.0
    %1342 = vmatpush1.msra.mxu0 0.0
    %1343 = vmatprep.subr.mxu0 0.0
    %1344 = vmatpush1.msra.mxu0 0.0
    %1345 = vmatprep.subr.mxu0 0.0
    %1346 = vmatpush1.msra.mxu0 0.0
    %1347 = vmatprep.subr.mxu0 0.0
    %1348 = vmatpush1.msra.mxu0 0.0
    %1349 = vmatprep.subr.mxu0 0.0
    %1350 = vmatpush1.msra.mxu0 0.0
    %1351 = vmatprep.mubr.f32.mxu0 0.0
    %1352 = vmatmul.mubr.f32.gmra.mrb[0].mxu0 %v1285
    %v1353 = vpop.f32.mrb[0].mxu0
    %v1354 = vadd.f32 %v279, %v1353
    %v1355 = vpop.f32.mrb[0].mxu0
    %1356 = vdwg.mxu0
    %v1358 = vsel %vm76, %v1354, 0
    %1360 = vmatprep.subr.mxu0 0.0
    %1361 = vmatpush1.msra.mxu0 %v253
    %1362 = vmatprep.subr.mxu0 0.0
    %1363 = vmatpush1.msra.mxu0 %v254
    %1364 = vmatprep.subr.mxu0 0.0
    %1365 = vmatpush1.msra.mxu0 %v255
    %1366 = vmatprep.subr.mxu0 0.0
    %1367 = vmatpush1.msra.mxu0 %v256
    %1368 = vmatprep.subr.mxu0 0.0
    %1369 = vmatpush1.msra.mxu0 0.0
    %1370 = vmatprep.subr.mxu0 0.0
    %1371 = vmatpush1.msra.mxu0 0.0
    %1372 = vmatprep.subr.mxu0 0.0
    %1373 = vmatpush1.msra.mxu0 0.0
    %1374 = vmatprep.subr.mxu0 0.0
    %1375 = vmatpush1.msra.mxu0 0.0
    %1376 = vmatprep.subr.mxu0 0.0
    %1377 = vmatpush1.msra.mxu0 0.0
    %1378 = vmatprep.subr.mxu0 0.0
    %1379 = vmatpush1.msra.mxu0 0.0
    %1380 = vmatprep.subr.mxu0 0.0
    %1381 = vmatpush1.msra.mxu0 0.0
    %1382 = vmatprep.subr.mxu0 0.0
    %1383 = vmatpush1.msra.mxu0 0.0
    %1384 = vmatprep.subr.mxu0 0.0
    %1385 = vmatpush1.msra.mxu0 0.0
    %1386 = vmatprep.subr.mxu0 0.0
    %1387 = vmatpush1.msra.mxu0 0.0
    %1388 = vmatprep.subr.mxu0 0.0
    %1389 = vmatpush1.msra.mxu0 0.0
    %1390 = vmatprep.subr.mxu0 0.0
    %1391 = vmatpush1.msra.mxu0 0.0
    %1392 = vmatprep.subr.mxu0 0.0
    %1393 = vmatpush1.msra.mxu0 0.0
    %1394 = vmatprep.subr.mxu0 0.0
    %1395 = vmatpush1.msra.mxu0 0.0
    %1396 = vmatprep.subr.mxu0 0.0
    %1397 = vmatpush1.msra.mxu0 0.0
    %1398 = vmatprep.subr.mxu0 0.0
    %1399 = vmatpush1.msra.mxu0 0.0
    %1400 = vmatprep.subr.mxu0 0.0
    %1401 = vmatpush1.msra.mxu0 0.0
    %1402 = vmatprep.subr.mxu0 0.0
    %1403 = vmatpush1.msra.mxu0 0.0
    %1404 = vmatprep.subr.mxu0 0.0
    %1405 = vmatpush1.msra.mxu0 0.0
    %1406 = vmatprep.subr.mxu0 0.0
    %1407 = vmatpush1.msra.mxu0 0.0
    %1408 = vmatprep.subr.mxu0 0.0
    %1409 = vmatpush1.msra.mxu0 0.0
    %1410 = vmatprep.subr.mxu0 0.0
    %1411 = vmatpush1.msra.mxu0 0.0
    %1412 = vmatprep.subr.mxu0 0.0
    %1413 = vmatpush1.msra.mxu0 0.0
    %1414 = vmatprep.subr.mxu0 0.0
    %1415 = vmatpush1.msra.mxu0 0.0
    %1416 = vmatprep.subr.mxu0 0.0
    %1417 = vmatpush1.msra.mxu0 0.0
    %1418 = vmatprep.subr.mxu0 0.0
    %1419 = vmatpush1.msra.mxu0 0.0
    %1420 = vmatprep.subr.mxu0 0.0
    %1421 = vmatpush1.msra.mxu0 0.0
    %1422 = vmatprep.subr.mxu0 0.0
    %1423 = vmatpush1.msra.mxu0 0.0
    %1424 = vmatprep.mubr.f32.mxu0 0.0
    %1425 = vmatmul.mubr.f32.gmra.mrb[0].mxu0 %v1358
    %v1426 = vpop.f32.mrb[0].mxu0
    %v1427 = vadd.f32 %v262, %v1426
    %v1428 = vpop.f32.mrb[0].mxu0
    %1429 = vdwg.mxu0
    %v1432 = vunpack.c.l.s4 1966171168
    %v1433 = vunpack.c.0.s8 %v1432
    %v1434 = vlaneseq
    %v1435 = vshrl.u32 %v1434, 7
    %v1436 = vsub.s32 %v1433, %v1435
    %v1437 = vrot.slane %v1427, %v1436
    %v1438 = vcombine.high %v1437, %v1437
    %v1440 = vunpack.c.l.s4 1966171168
    %v1441 = vunpack.c.0.s8 %v1440
    %v1442 = vlaneseq
    %v1443 = vshrl.u32 %v1442, 7
    %v1444 = vsub.s32 %v1441, %v1443
    %v1445 = vrot.slane %v1437, %v1444
    %v1447 = vunpack.c.l.s4 1966171168
    %v1448 = vunpack.c.0.s8 %v1447
    %v1449 = vlaneseq
    %v1450 = vshrl.u32 %v1449, 7
    %v1451 = vsub.s32 %v1448, %v1450
    %v1452 = vrot.slane %v1438, %v1451
    %v1453 = vlaneseq
    %v1454 = vshrl.u32 %v1453, 7
    %v1455 = vsub.s32 0, %v1454
    %v1456 = vrot.slane %v1445, %v1455
    %v1457 = vlaneseq
    %v1458 = vshrl.u32 %v1457, 7
    %v1459 = vsub.s32 0, %v1458
    %v1460 = vrot.slane %v1452, %v1459
    %v1463 = vadd.f32 %v1456, %v516
    %v1464 = vadd.f32 %v1460, %v518
    %v1465 = vtanh.pop %v1463
    %v1466 = vtanh.pop %v1464
    %v1467 = vmul.f32 %v1465, %v840
    %v1468 = vmul.f32 %v1466, %v840
    %v1469 = vsel %vm76, %v1467, 0.0
    %1470 = vadd.xlane.f32.xlu0 %v1469
    %v1471 = vpop.xlane.xlu0 %1470
    %v1472 = vsel %vm76, %v1468, 0.0
    %1473 = vadd.xlane.f32.xlu0 %v1472
    %v1474 = vpop.xlane.xlu0 %1473
    %v1477 = vlaneseq
    %v1478 = vshrl.u32 %v1477, 7
    %v1479 = vsub.s32 %v301, %v1478
    %v1480 = vrot.slane %v1471, %v1479
    %v1481 = vlaneseq
    %v1482 = vshrl.u32 %v1481, 7
    %v1483 = vsub.s32 %v301, %v1482
    %v1484 = vrot.slane %v1474, %v1483
    %v1485 = vsel %vm559, %v1484, %v1480
    %v1487 = vsel %vm562, %v1485, -inf
    %1488 = vmax.xlane.f32.xlu0 %v1487
    %v1489 = vpop.xlane.xlu0 %1488
    %v1491 = vlaneseq
    %v1492 = vshrl.u32 %v1491, 7
    %v1493 = vsub.s32 0, %v1492
    %v1494 = vrot.slane %v1489, %v1493
    %v1495 = vlaneseq
    %v1496 = vshrl.u32 %v1495, 7
    %v1497 = vsub.s32 1, %v1496
    %v1498 = vrot.slane %v1489, %v1497
    %vm1501 = vcmp.eq.f32.partialorder %v1471, %v1494
    %vm1502 = vcmp.eq.f32.partialorder %v1474, %v1498
    %v1503 = vsel %vm1501, %v581, 8
    %v1504 = vsel %vm1502, %v581, 8
    %1505 = vset.pattern.permute.xlu0 0
    %1506 = vperm.xlu0 %1505, %v1503
    %v1507 = vpop.permute.xlu0 %1506
    %1508 = vset.pattern.permute.xlu0 0
    %1509 = vperm.xlu0 %1508, %v1504
    %v1510 = vpop.permute.xlu0 %1509
    %v1511 = vlaneseq
    %v1512 = vshrl.u32 %v1511, 7
    %v1513 = vsub.s32 %v301, %v1512
    %v1514 = vrot.slane %v1507, %v1513
    %v1515 = vlaneseq
    %v1516 = vshrl.u32 %v1515, 7
    %v1517 = vsub.s32 %v301, %v1516
    %v1518 = vrot.slane %v1510, %v1517
    %v1519 = vsel %vm559, %v1518, %v1514
    %v1520 = vsel %vm562, %v1519, 2147483647
    %v1521 = vand.u32 %v1520, 65535
    %v1522 = vshra.s32 %v1520, 16
    %v1523 = vcvt.s32.f32 %v1521
    %v1524 = vcvt.s32.f32 %v1522
    %1525 = vmin.xlane.f32.xlu0 %v1524
    %v1526 = vpop.xlane.xlu0 %1525
    %vm1527 = vcmp.eq.f32.partialorder %v1524, %v1526
    %v1528 = vsel %vm1527, %v1523, inf
    %1529 = vmin.xlane.f32.xlu0 %v1528
    %v1530 = vpop.xlane.xlu0 %1529
    %v1531 = vcvt.f32.s32 %v1530
    %v1532 = vcvt.f32.s32 %v1526
    %v1533 = vshll.u32 %v1532, 16
    %v1534 = vadd.s32 %v1533, %v1531
    %vm1535 = vcmp.eq.s32.totalorder %v301, %v1534
    %v1536 = vsel %vm1535, 1, 0
    %v1537 = vcvt.s32.f32 %v1536
    %v1538 = vlaneseq
    %v1539 = vshrl.u32 %v1538, 7
    %v1540 = vsub.s32 0, %v1539
    %v1541 = vrot.slane %v1537, %v1540
    %1543 = vbcast.lane.b32.xlu0 %v1541, 256
    %v1544 = vpop.permute.xlu0 %1543
    %v1545 = vlaneseq
    %v1546 = vshrl.u32 %v1545, 7
    %v1547 = vsub.s32 1, %v1546
    %v1548 = vrot.slane %v1537, %v1547
    %1550 = vbcast.lane.b32.xlu0 %v1548, 256
    %v1551 = vpop.permute.xlu0 %1550
    %v1552 = vmul.f32 %v62, %v1544
    %v1553 = vmul.f32 %v63, %v1551
    %v1554 = vsel %vm76, %v1552, 0.0
    %v1555 = vrot.slane %v1554, 4
    %v1556 = vadd.f32 %v1554, %v1555
    %v1557 = vrot.slane %v1556, 2
    %v1558 = vadd.f32 %v1556, %v1557
    %v1559 = vrot.slane %v1558, 1
    %v1560 = vadd.f32 %v1558, %v1559
    %v1561 = vsel %vm76, %v1553, 0.0
    %v1562 = vrot.slane %v1561, 4
    %v1563 = vadd.f32 %v1561, %v1562
    %v1564 = vrot.slane %v1563, 2
    %v1565 = vadd.f32 %v1563, %v1564
    %v1566 = vrot.slane %v1565, 1
    %v1567 = vadd.f32 %v1565, %v1566
    %v1570 = vsel %vm559, %v1567, %v1560
    %1572 = vrot.lane.b32.xlu0 %v1281, 32
    %v1573 = vpop.permute.xlu0 %1572
    %1575 = vrot.lane.b32.xlu0 %v1057, 32
    %v1576 = vpop.permute.xlu0 %1575
    %v1578 = vsel %vm76, %v1570, %v1573
    %v1579 = vsel %vm652, %v1578, %v1576
    %v1581 = vsel %vm955, %v1579, 0
    %1583 = vmatprep.subr.mxu0 0.0
    %1584 = vmatpush1.msra.mxu0 %v281
    %1585 = vmatprep.subr.mxu0 0.0
    %1586 = vmatpush1.msra.mxu0 %v282
    %1587 = vmatprep.subr.mxu0 0.0
    %1588 = vmatpush1.msra.mxu0 %v283
    %1589 = vmatprep.subr.mxu0 0.0
    %1590 = vmatpush1.msra.mxu0 %v284
    %1591 = vmatprep.subr.mxu0 0.0
    %1592 = vmatpush1.msra.mxu0 %v285
    %1593 = vmatprep.subr.mxu0 0.0
    %1594 = vmatpush1.msra.mxu0 %v286
    %1595 = vmatprep.subr.mxu0 0.0
    %1596 = vmatpush1.msra.mxu0 %v287
    %1597 = vmatprep.subr.mxu0 0.0
    %1598 = vmatpush1.msra.mxu0 %v288
    %1599 = vmatprep.subr.mxu0 0.0
    %1600 = vmatpush1.msra.mxu0 %v289
    %1601 = vmatprep.subr.mxu0 0.0
    %1602 = vmatpush1.msra.mxu0 %v290
    %1603 = vmatprep.subr.mxu0 0.0
    %1604 = vmatpush1.msra.mxu0 %v291
    %1605 = vmatprep.subr.mxu0 0.0
    %1606 = vmatpush1.msra.mxu0 %v292
    %1607 = vmatprep.subr.mxu0 0.0
    %1608 = vmatpush1.msra.mxu0 0.0
    %1609 = vmatprep.subr.mxu0 0.0
    %1610 = vmatpush1.msra.mxu0 0.0
    %1611 = vmatprep.subr.mxu0 0.0
    %1612 = vmatpush1.msra.mxu0 0.0
    %1613 = vmatprep.subr.mxu0 0.0
    %1614 = vmatpush1.msra.mxu0 0.0
    %1615 = vmatprep.subr.mxu0 0.0
    %1616 = vmatpush1.msra.mxu0 0.0
    %1617 = vmatprep.subr.mxu0 0.0
    %1618 = vmatpush1.msra.mxu0 0.0
    %1619 = vmatprep.subr.mxu0 0.0
    %1620 = vmatpush1.msra.mxu0 0.0
    %1621 = vmatprep.subr.mxu0 0.0
    %1622 = vmatpush1.msra.mxu0 0.0
    %1623 = vmatprep.subr.mxu0 0.0
    %1624 = vmatpush1.msra.mxu0 0.0
    %1625 = vmatprep.subr.mxu0 0.0
    %1626 = vmatpush1.msra.mxu0 0.0
    %1627 = vmatprep.subr.mxu0 0.0
    %1628 = vmatpush1.msra.mxu0 0.0
    %1629 = vmatprep.subr.mxu0 0.0
    %1630 = vmatpush1.msra.mxu0 0.0
    %1631 = vmatprep.subr.mxu0 0.0
    %1632 = vmatpush1.msra.mxu0 0.0
    %1633 = vmatprep.subr.mxu0 0.0
    %1634 = vmatpush1.msra.mxu0 0.0
    %1635 = vmatprep.subr.mxu0 0.0
    %1636 = vmatpush1.msra.mxu0 0.0
    %1637 = vmatprep.subr.mxu0 0.0
    %1638 = vmatpush1.msra.mxu0 0.0
    %1639 = vmatprep.subr.mxu0 0.0
    %1640 = vmatpush1.msra.mxu0 0.0
    %1641 = vmatprep.subr.mxu0 0.0
    %1642 = vmatpush1.msra.mxu0 0.0
    %1643 = vmatprep.subr.mxu0 0.0
    %1644 = vmatpush1.msra.mxu0 0.0
    %1645 = vmatprep.subr.mxu0 0.0
    %1646 = vmatpush1.msra.mxu0 0.0
    %1647 = vmatprep.mubr.f32.mxu0 0.0
    %1648 = vmatmul.mubr.f32.gmra.mrb[0].mxu0 %v1581
    %v1649 = vpop.f32.mrb[0].mxu0
    %v1650 = vadd.f32 %v298, %v1649
    %v1651 = vpop.f32.mrb[0].mxu0
    %1652 = vdwg.mxu0
    %s1653 = scalar_lea.vmem %s17, 2
    %1654 = vst.msk [vmem:[%s1653] sm:$0x3] %vm562, %v1485
    %s1655 = scalar_lea.vmem %s18, 2
    %1656 = vst.msk [vmem:[%s1655] sm:$0x3] %vm562, %v1196
    %s1657 = scalar_lea.vmem [#allocation2], 2
    %1658 = vst.msk [vmem:[%s1657] sm:$0x3] %vm1031, %v1650
    %v1659 = vadd.f32 %v147, %v1130
    %v1660 = vxor.u32 %v1659, 2147483648
    %v1661 = vmul.f32 %v1660, 1.442695
    %v1662 = vpow.pop %v1661
    %v1663 = vadd.f32 %v1662, 1.0
    %v1664 = vrcp.pop %v1663
    %v1665 = vmul.f32 1.0, %v1664
    %1666 = vrot.lane.b32.xlu0 %v1130, 64
    %v1667 = vpop.permute.xlu0 %1666
    %v1669 = vmul.f32 %v1665, %v1667
    %1671 = vrot.lane.b32.xlu0 %v1669, 64
    %v1672 = vpop.permute.xlu0 %1671
    %v1674 = vadd.f32 %v147, %v1672
    %v1675 = vtanh.pop %v1674
    %v1676 = vsub.f32 1.0, %v1665
    %1678 = vrot.lane.b32.xlu0 %v1675, 96
    %v1679 = vpop.permute.xlu0 %1678
    %v1681 = vmul.f32 %v1676, %v1679
    %v1682 = vmul.f32 %v1665, %v1057
    %v1683 = vadd.f32 %v1681, %v1682
    %1685 = vrot.lane.b32.xlu0 %v1683, 96
    %v1686 = vpop.permute.xlu0 %1685
    %v1687 = vsel %vm76, %v1686, 0
    %1689 = vmatprep.subr.mxu0 0.0
    %1690 = vmatpush1.msra.mxu0 %v242
    %1691 = vmatprep.subr.mxu0 0.0
    %1692 = vmatpush1.msra.mxu0 %v243
    %1693 = vmatprep.subr.mxu0 0.0
    %1694 = vmatpush1.msra.mxu0 %v244
    %1695 = vmatprep.subr.mxu0 0.0
    %1696 = vmatpush1.msra.mxu0 %v245
    %1697 = vmatprep.subr.mxu0 0.0
    %1698 = vmatpush1.msra.mxu0 0.0
    %1699 = vmatprep.subr.mxu0 0.0
    %1700 = vmatpush1.msra.mxu0 0.0
    %1701 = vmatprep.subr.mxu0 0.0
    %1702 = vmatpush1.msra.mxu0 0.0
    %1703 = vmatprep.subr.mxu0 0.0
    %1704 = vmatpush1.msra.mxu0 0.0
    %1705 = vmatprep.subr.mxu0 0.0
    %1706 = vmatpush1.msra.mxu0 0.0
    %1707 = vmatprep.subr.mxu0 0.0
    %1708 = vmatpush1.msra.mxu0 0.0
    %1709 = vmatprep.subr.mxu0 0.0
    %1710 = vmatpush1.msra.mxu0 0.0
    %1711 = vmatprep.subr.mxu0 0.0
    %1712 = vmatpush1.msra.mxu0 0.0
    %1713 = vmatprep.subr.mxu0 0.0
    %1714 = vmatpush1.msra.mxu0 0.0
    %1715 = vmatprep.subr.mxu0 0.0
    %1716 = vmatpush1.msra.mxu0 0.0
    %1717 = vmatprep.subr.mxu0 0.0
    %1718 = vmatpush1.msra.mxu0 0.0
    %1719 = vmatprep.subr.mxu0 0.0
    %1720 = vmatpush1.msra.mxu0 0.0
    %1721 = vmatprep.subr.mxu0 0.0
    %1722 = vmatpush1.msra.mxu0 0.0
    %1723 = vmatprep.subr.mxu0 0.0
    %1724 = vmatpush1.msra.mxu0 0.0
    %1725 = vmatprep.subr.mxu0 0.0
    %1726 = vmatpush1.msra.mxu0 0.0
    %1727 = vmatprep.subr.mxu0 0.0
    %1728 = vmatpush1.msra.mxu0 0.0
    %1729 = vmatprep.subr.mxu0 0.0
    %1730 = vmatpush1.msra.mxu0 0.0
    %1731 = vmatprep.subr.mxu0 0.0
    %1732 = vmatpush1.msra.mxu0 0.0
    %1733 = vmatprep.subr.mxu0 0.0
    %1734 = vmatpush1.msra.mxu0 0.0
    %1735 = vmatprep.subr.mxu0 0.0
    %1736 = vmatpush1.msra.mxu0 0.0
    %1737 = vmatprep.subr.mxu0 0.0
    %1738 = vmatpush1.msra.mxu0 0.0
    %1739 = vmatprep.subr.mxu0 0.0
    %1740 = vmatpush1.msra.mxu0 0.0
    %1741 = vmatprep.subr.mxu0 0.0
    %1742 = vmatpush1.msra.mxu0 0.0
    %1743 = vmatprep.subr.mxu0 0.0
    %1744 = vmatpush1.msra.mxu0 0.0
    %1745 = vmatprep.subr.mxu0 0.0
    %1746 = vmatpush1.msra.mxu0 0.0
    %1747 = vmatprep.subr.mxu0 0.0
    %1748 = vmatpush1.msra.mxu0 0.0
    %1749 = vmatprep.subr.mxu0 0.0
    %1750 = vmatpush1.msra.mxu0 0.0
    %1751 = vmatprep.subr.mxu0 0.0
    %1752 = vmatpush1.msra.mxu0 0.0
    %1753 = vmatprep.mubr.f32.mxu0 0.0
    %1754 = vmatmul.mubr.f32.gmra.mrb[0].mxu0 %v1687
    %v1755 = vpop.f32.mrb[0].mxu0
    %v1756 = vadd.f32 %v251, %v1755
    %v1757 = vpop.f32.mrb[0].mxu0
    %1758 = vdwg.mxu0
    %v1761 = vunpack.c.l.s4 1966171168
    %v1762 = vunpack.c.0.s8 %v1761
    %v1763 = vlaneseq
    %v1764 = vshrl.u32 %v1763, 7
    %v1765 = vsub.s32 %v1762, %v1764
    %v1766 = vrot.slane %v1756, %v1765
    %v1767 = vcombine.high %v1766, %v1766
    %v1769 = vunpack.c.l.s4 1966171168
    %v1770 = vunpack.c.0.s8 %v1769
    %v1771 = vlaneseq
    %v1772 = vshrl.u32 %v1771, 7
    %v1773 = vsub.s32 %v1770, %v1772
    %v1774 = vrot.slane %v1766, %v1773
    %v1776 = vunpack.c.l.s4 1966171168
    %v1777 = vunpack.c.0.s8 %v1776
    %v1778 = vlaneseq
    %v1779 = vshrl.u32 %v1778, 7
    %v1780 = vsub.s32 %v1777, %v1779
    %v1781 = vrot.slane %v1767, %v1780
    %v1782 = vlaneseq
    %v1783 = vshrl.u32 %v1782, 7
    %v1784 = vsub.s32 0, %v1783
    %v1785 = vrot.slane %v1774, %v1784
    %v1786 = vlaneseq
    %v1787 = vshrl.u32 %v1786, 7
    %v1788 = vsub.s32 0, %v1787
    %v1789 = vrot.slane %v1781, %v1788
    %v1792 = vadd.f32 %v1785, %v516
    %v1793 = vadd.f32 %v1789, %v518
    %v1794 = vtanh.pop %v1792
    %v1795 = vtanh.pop %v1793
    %v1796 = vmul.f32 %v1794, %v531
    %v1797 = vmul.f32 %v1795, %v531
    %1800 = vrot.lane.b32.xlu0 %v1796, 32
    %v1801 = vpop.permute.xlu0 %1800
    %1802 = vrot.lane.b32.xlu0 %v1797, 32
    %v1803 = vpop.permute.xlu0 %1802
    %v1806 = vsel %vm76, %v1801, 0.0
    %1807 = vadd.xlane.f32.xlu0 %v1806
    %v1808 = vpop.xlane.xlu0 %1807
    %v1809 = vsel %vm76, %v1803, 0.0
    %1810 = vadd.xlane.f32.xlu0 %v1809
    %v1811 = vpop.xlane.xlu0 %1810
    %v1814 = vlaneseq
    %v1815 = vshrl.u32 %v1814, 7
    %v1816 = vsub.s32 %v301, %v1815
    %v1817 = vrot.slane %v1808, %v1816
    %v1818 = vlaneseq
    %v1819 = vshrl.u32 %v1818, 7
    %v1820 = vsub.s32 %v301, %v1819
    %v1821 = vrot.slane %v1811, %v1820
    %v1822 = vsel %vm559, %v1821, %v1817
    %v1824 = vsel %vm562, %v1822, -inf
    %1825 = vmax.xlane.f32.xlu0 %v1824
    %v1826 = vpop.xlane.xlu0 %1825
    %v1828 = vlaneseq
    %v1829 = vshrl.u32 %v1828, 7
    %v1830 = vsub.s32 0, %v1829
    %v1831 = vrot.slane %v1826, %v1830
    %v1832 = vlaneseq
    %v1833 = vshrl.u32 %v1832, 7
    %v1834 = vsub.s32 1, %v1833
    %v1835 = vrot.slane %v1826, %v1834
    %vm1838 = vcmp.eq.f32.partialorder %v1808, %v1831
    %vm1839 = vcmp.eq.f32.partialorder %v1811, %v1835
    %v1840 = vsel %vm1838, %v581, 8
    %v1841 = vsel %vm1839, %v581, 8
    %1842 = vset.pattern.permute.xlu0 0
    %1843 = vperm.xlu0 %1842, %v1840
    %v1844 = vpop.permute.xlu0 %1843
    %1845 = vset.pattern.permute.xlu0 0
    %1846 = vperm.xlu0 %1845, %v1841
    %v1847 = vpop.permute.xlu0 %1846
    %v1848 = vlaneseq
    %v1849 = vshrl.u32 %v1848, 7
    %v1850 = vsub.s32 %v301, %v1849
    %v1851 = vrot.slane %v1844, %v1850
    %v1852 = vlaneseq
    %v1853 = vshrl.u32 %v1852, 7
    %v1854 = vsub.s32 %v301, %v1853
    %v1855 = vrot.slane %v1847, %v1854
    %v1856 = vsel %vm559, %v1855, %v1851
    %v1857 = vsel %vm562, %v1856, 2147483647
    %v1858 = vand.u32 %v1857, 65535
    %v1859 = vshra.s32 %v1857, 16
    %v1860 = vcvt.s32.f32 %v1858
    %v1861 = vcvt.s32.f32 %v1859
    %1862 = vmin.xlane.f32.xlu0 %v1861
    %v1863 = vpop.xlane.xlu0 %1862
    %vm1864 = vcmp.eq.f32.partialorder %v1861, %v1863
    %v1865 = vsel %vm1864, %v1860, inf
    %1866 = vmin.xlane.f32.xlu0 %v1865
    %v1867 = vpop.xlane.xlu0 %1866
    %v1868 = vcvt.f32.s32 %v1867
    %v1869 = vcvt.f32.s32 %v1863
    %v1870 = vshll.u32 %v1869, 16
    %v1871 = vadd.s32 %v1870, %v1868
    %vm1872 = vcmp.eq.s32.totalorder %v301, %v1871
    %v1873 = vsel %vm1872, 1, 0
    %v1874 = vcvt.s32.f32 %v1873
    %v1875 = vlaneseq
    %v1876 = vshrl.u32 %v1875, 7
    %v1877 = vsub.s32 0, %v1876
    %v1878 = vrot.slane %v1874, %v1877
    %1880 = vbcast.lane.b32.xlu0 %v1878, 256
    %v1881 = vpop.permute.xlu0 %1880
    %v1882 = vlaneseq
    %v1883 = vshrl.u32 %v1882, 7
    %v1884 = vsub.s32 1, %v1883
    %v1885 = vrot.slane %v1874, %v1884
    %1887 = vbcast.lane.b32.xlu0 %v1885, 256
    %v1888 = vpop.permute.xlu0 %1887
    %v1889 = vmul.f32 %v62, %v1881
    %v1890 = vmul.f32 %v63, %v1888
    %v1891 = vsel %vm76, %v1889, 0.0
    %v1892 = vrot.slane %v1891, 4
    %v1893 = vadd.f32 %v1891, %v1892
    %v1894 = vrot.slane %v1893, 2
    %v1895 = vadd.f32 %v1893, %v1894
    %v1896 = vrot.slane %v1895, 1
    %v1897 = vadd.f32 %v1895, %v1896
    %v1898 = vsel %vm76, %v1890, 0.0
    %v1899 = vrot.slane %v1898, 4
    %v1900 = vadd.f32 %v1898, %v1899
    %v1901 = vrot.slane %v1900, 2
    %v1902 = vadd.f32 %v1900, %v1901
    %v1903 = vrot.slane %v1902, 1
    %v1904 = vadd.f32 %v1902, %v1903
    %v1907 = vsel %vm559, %v1904, %v1897
    %v1909 = vsel %vm76, %v1907, %v1683
    %v1911 = vsel %vm652, %v1909, 0
    %1913 = vmatprep.subr.mxu0 0.0
    %1914 = vmatpush1.msra.mxu0 %v266
    %1915 = vmatprep.subr.mxu0 0.0
    %1916 = vmatpush1.msra.mxu0 %v267
    %1917 = vmatprep.subr.mxu0 0.0
    %1918 = vmatpush1.msra.mxu0 %v268
    %1919 = vmatprep.subr.mxu0 0.0
    %1920 = vmatpush1.msra.mxu0 %v269
    %1921 = vmatprep.subr.mxu0 0.0
    %1922 = vmatpush1.msra.mxu0 %v270
    %1923 = vmatprep.subr.mxu0 0.0
    %1924 = vmatpush1.msra.mxu0 %v271
    %1925 = vmatprep.subr.mxu0 0.0
    %1926 = vmatpush1.msra.mxu0 %v272
    %1927 = vmatprep.subr.mxu0 0.0
    %1928 = vmatpush1.msra.mxu0 %v273
    %1929 = vmatprep.subr.mxu0 0.0
    %1930 = vmatpush1.msra.mxu0 0.0
    %1931 = vmatprep.subr.mxu0 0.0
    %1932 = vmatpush1.msra.mxu0 0.0
    %1933 = vmatprep.subr.mxu0 0.0
    %1934 = vmatpush1.msra.mxu0 0.0
    %1935 = vmatprep.subr.mxu0 0.0
    %1936 = vmatpush1.msra.mxu0 0.0
    %1937 = vmatprep.subr.mxu0 0.0
    %1938 = vmatpush1.msra.mxu0 0.0
    %1939 = vmatprep.subr.mxu0 0.0
    %1940 = vmatpush1.msra.mxu0 0.0
    %1941 = vmatprep.subr.mxu0 0.0
    %1942 = vmatpush1.msra.mxu0 0.0
    %1943 = vmatprep.subr.mxu0 0.0
    %1944 = vmatpush1.msra.mxu0 0.0
    %1945 = vmatprep.subr.mxu0 0.0
    %1946 = vmatpush1.msra.mxu0 0.0
    %1947 = vmatprep.subr.mxu0 0.0
    %1948 = vmatpush1.msra.mxu0 0.0
    %1949 = vmatprep.subr.mxu0 0.0
    %1950 = vmatpush1.msra.mxu0 0.0
    %1951 = vmatprep.subr.mxu0 0.0
    %1952 = vmatpush1.msra.mxu0 0.0
    %1953 = vmatprep.subr.mxu0 0.0
    %1954 = vmatpush1.msra.mxu0 0.0
    %1955 = vmatprep.subr.mxu0 0.0
    %1956 = vmatpush1.msra.mxu0 0.0
    %1957 = vmatprep.subr.mxu0 0.0
    %1958 = vmatpush1.msra.mxu0 0.0
    %1959 = vmatprep.subr.mxu0 0.0
    %1960 = vmatpush1.msra.mxu0 0.0
    %1961 = vmatprep.subr.mxu0 0.0
    %1962 = vmatpush1.msra.mxu0 0.0
    %1963 = vmatprep.subr.mxu0 0.0
    %1964 = vmatpush1.msra.mxu0 0.0
    %1965 = vmatprep.subr.mxu0 0.0
    %1966 = vmatpush1.msra.mxu0 0.0
    %1967 = vmatprep.subr.mxu0 0.0
    %1968 = vmatpush1.msra.mxu0 0.0
    %1969 = vmatprep.subr.mxu0 0.0
    %1970 = vmatpush1.msra.mxu0 0.0
    %1971 = vmatprep.subr.mxu0 0.0
    %1972 = vmatpush1.msra.mxu0 0.0
    %1973 = vmatprep.subr.mxu0 0.0
    %1974 = vmatpush1.msra.mxu0 0.0
    %1975 = vmatprep.subr.mxu0 0.0
    %1976 = vmatpush1.msra.mxu0 0.0
    %1977 = vmatprep.mubr.f32.mxu0 0.0
    %1978 = vmatmul.mubr.f32.gmra.mrb[0].mxu0 %v1911
    %v1979 = vpop.f32.mrb[0].mxu0
    %v1980 = vadd.f32 %v279, %v1979
    %v1981 = vpop.f32.mrb[0].mxu0
    %1982 = vdwg.mxu0
    %v1984 = vsel %vm76, %v1980, 0
    %1986 = vmatprep.subr.mxu0 0.0
    %1987 = vmatpush1.msra.mxu0 %v253
    %1988 = vmatprep.subr.mxu0 0.0
    %1989 = vmatpush1.msra.mxu0 %v254
    %1990 = vmatprep.subr.mxu0 0.0
    %1991 = vmatpush1.msra.mxu0 %v255
    %1992 = vmatprep.subr.mxu0 0.0
    %1993 = vmatpush1.msra.mxu0 %v256
    %1994 = vmatprep.subr.mxu0 0.0
    %1995 = vmatpush1.msra.mxu0 0.0
    %1996 = vmatprep.subr.mxu0 0.0
    %1997 = vmatpush1.msra.mxu0 0.0
    %1998 = vmatprep.subr.mxu0 0.0
    %1999 = vmatpush1.msra.mxu0 0.0
    %2000 = vmatprep.subr.mxu0 0.0
    %2001 = vmatpush1.msra.mxu0 0.0
    %2002 = vmatprep.subr.mxu0 0.0
    %2003 = vmatpush1.msra.mxu0 0.0
    %2004 = vmatprep.subr.mxu0 0.0
    %2005 = vmatpush1.msra.mxu0 0.0
    %2006 = vmatprep.subr.mxu0 0.0
    %2007 = vmatpush1.msra.mxu0 0.0
    %2008 = vmatprep.subr.mxu0 0.0
    %2009 = vmatpush1.msra.mxu0 0.0
    %2010 = vmatprep.subr.mxu0 0.0
    %2011 = vmatpush1.msra.mxu0 0.0
    %2012 = vmatprep.subr.mxu0 0.0
    %2013 = vmatpush1.msra.mxu0 0.0
    %2014 = vmatprep.subr.mxu0 0.0
    %2015 = vmatpush1.msra.mxu0 0.0
    %2016 = vmatprep.subr.mxu0 0.0
    %2017 = vmatpush1.msra.mxu0 0.0
    %2018 = vmatprep.subr.mxu0 0.0
    %2019 = vmatpush1.msra.mxu0 0.0
    %2020 = vmatprep.subr.mxu0 0.0
    %2021 = vmatpush1.msra.mxu0 0.0
    %2022 = vmatprep.subr.mxu0 0.0
    %2023 = vmatpush1.msra.mxu0 0.0
    %2024 = vmatprep.subr.mxu0 0.0
    %2025 = vmatpush1.msra.mxu0 0.0
    %2026 = vmatprep.subr.mxu0 0.0
    %2027 = vmatpush1.msra.mxu0 0.0
    %2028 = vmatprep.subr.mxu0 0.0
    %2029 = vmatpush1.msra.mxu0 0.0
    %2030 = vmatprep.subr.mxu0 0.0
    %2031 = vmatpush1.msra.mxu0 0.0
    %2032 = vmatprep.subr.mxu0 0.0
    %2033 = vmatpush1.msra.mxu0 0.0
    %2034 = vmatprep.subr.mxu0 0.0
    %2035 = vmatpush1.msra.mxu0 0.0
    %2036 = vmatprep.subr.mxu0 0.0
    %2037 = vmatpush1.msra.mxu0 0.0
    %2038 = vmatprep.subr.mxu0 0.0
    %2039 = vmatpush1.msra.mxu0 0.0
    %2040 = vmatprep.subr.mxu0 0.0
    %2041 = vmatpush1.msra.mxu0 0.0
    %2042 = vmatprep.subr.mxu0 0.0
    %2043 = vmatpush1.msra.mxu0 0.0
    %2044 = vmatprep.subr.mxu0 0.0
    %2045 = vmatpush1.msra.mxu0 0.0
    %2046 = vmatprep.subr.mxu0 0.0
    %2047 = vmatpush1.msra.mxu0 0.0
    %2048 = vmatprep.subr.mxu0 0.0
    %2049 = vmatpush1.msra.mxu0 0.0
    %2050 = vmatprep.mubr.f32.mxu0 0.0
    %2051 = vmatmul.mubr.f32.gmra.mrb[0].mxu0 %v1984
    %v2052 = vpop.f32.mrb[0].mxu0
    %v2053 = vadd.f32 %v262, %v2052
    %v2054 = vpop.f32.mrb[0].mxu0
    %2055 = vdwg.mxu0
    %v2058 = vunpack.c.l.s4 1966171168
    %v2059 = vunpack.c.0.s8 %v2058
    %v2060 = vlaneseq
    %v2061 = vshrl.u32 %v2060, 7
    %v2062 = vsub.s32 %v2059, %v2061
    %v2063 = vrot.slane %v2053, %v2062
    %v2064 = vcombine.high %v2063, %v2063
    %v2066 = vunpack.c.l.s4 1966171168
    %v2067 = vunpack.c.0.s8 %v2066
    %v2068 = vlaneseq
    %v2069 = vshrl.u32 %v2068, 7
    %v2070 = vsub.s32 %v2067, %v2069
    %v2071 = vrot.slane %v2063, %v2070
    %v2073 = vunpack.c.l.s4 1966171168
    %v2074 = vunpack.c.0.s8 %v2073
    %v2075 = vlaneseq
    %v2076 = vshrl.u32 %v2075, 7
    %v2077 = vsub.s32 %v2074, %v2076
    %v2078 = vrot.slane %v2064, %v2077
    %v2079 = vlaneseq
    %v2080 = vshrl.u32 %v2079, 7
    %v2081 = vsub.s32 0, %v2080
    %v2082 = vrot.slane %v2071, %v2081
    %v2083 = vlaneseq
    %v2084 = vshrl.u32 %v2083, 7
    %v2085 = vsub.s32 0, %v2084
    %v2086 = vrot.slane %v2078, %v2085
    %v2089 = vadd.f32 %v2082, %v516
    %v2090 = vadd.f32 %v2086, %v518
    %v2091 = vtanh.pop %v2089
    %v2092 = vtanh.pop %v2090
    %v2093 = vmul.f32 %v2091, %v840
    %v2094 = vmul.f32 %v2092, %v840
    %v2095 = vsel %vm76, %v2093, 0.0
    %2096 = vadd.xlane.f32.xlu0 %v2095
    %v2097 = vpop.xlane.xlu0 %2096
    %v2098 = vsel %vm76, %v2094, 0.0
    %2099 = vadd.xlane.f32.xlu0 %v2098
    %v2100 = vpop.xlane.xlu0 %2099
    %v2103 = vlaneseq
    %v2104 = vshrl.u32 %v2103, 7
    %v2105 = vsub.s32 %v301, %v2104
    %v2106 = vrot.slane %v2097, %v2105
    %v2107 = vlaneseq
    %v2108 = vshrl.u32 %v2107, 7
    %v2109 = vsub.s32 %v301, %v2108
    %v2110 = vrot.slane %v2100, %v2109
    %v2111 = vsel %vm559, %v2110, %v2106
    %v2113 = vsel %vm562, %v2111, -inf
    %2114 = vmax.xlane.f32.xlu0 %v2113
    %v2115 = vpop.xlane.xlu0 %2114
    %v2117 = vlaneseq
    %v2118 = vshrl.u32 %v2117, 7
    %v2119 = vsub.s32 0, %v2118
    %v2120 = vrot.slane %v2115, %v2119
    %v2121 = vlaneseq
    %v2122 = vshrl.u32 %v2121, 7
    %v2123 = vsub.s32 1, %v2122
    %v2124 = vrot.slane %v2115, %v2123
    %vm2127 = vcmp.eq.f32.partialorder %v2097, %v2120
    %vm2128 = vcmp.eq.f32.partialorder %v2100, %v2124
    %v2129 = vsel %vm2127, %v581, 8
    %v2130 = vsel %vm2128, %v581, 8
    %2131 = vset.pattern.permute.xlu0 0
    %2132 = vperm.xlu0 %2131, %v2129
    %v2133 = vpop.permute.xlu0 %2132
    %2134 = vset.pattern.permute.xlu0 0
    %2135 = vperm.xlu0 %2134, %v2130
    %v2136 = vpop.permute.xlu0 %2135
    %v2137 = vlaneseq
    %v2138 = vshrl.u32 %v2137, 7
    %v2139 = vsub.s32 %v301, %v2138
    %v2140 = vrot.slane %v2133, %v2139
    %v2141 = vlaneseq
    %v2142 = vshrl.u32 %v2141, 7
    %v2143 = vsub.s32 %v301, %v2142
    %v2144 = vrot.slane %v2136, %v2143
    %v2145 = vsel %vm559, %v2144, %v2140
    %v2146 = vsel %vm562, %v2145, 2147483647
    %v2147 = vand.u32 %v2146, 65535
    %v2148 = vshra.s32 %v2146, 16
    %v2149 = vcvt.s32.f32 %v2147
    %v2150 = vcvt.s32.f32 %v2148
    %2151 = vmin.xlane.f32.xlu0 %v2150
    %v2152 = vpop.xlane.xlu0 %2151
    %vm2153 = vcmp.eq.f32.partialorder %v2150, %v2152
    %v2154 = vsel %vm2153, %v2149, inf
    %2155 = vmin.xlane.f32.xlu0 %v2154
    %v2156 = vpop.xlane.xlu0 %2155
    %v2157 = vcvt.f32.s32 %v2156
    %v2158 = vcvt.f32.s32 %v2152
    %v2159 = vshll.u32 %v2158, 16
    %v2160 = vadd.s32 %v2159, %v2157
    %vm2161 = vcmp.eq.s32.totalorder %v301, %v2160
    %v2162 = vsel %vm2161, 1, 0
    %v2163 = vcvt.s32.f32 %v2162
    %v2164 = vlaneseq
    %v2165 = vshrl.u32 %v2164, 7
    %v2166 = vsub.s32 0, %v2165
    %v2167 = vrot.slane %v2163, %v2166
    %2169 = vbcast.lane.b32.xlu0 %v2167, 256
    %v2170 = vpop.permute.xlu0 %2169
    %v2171 = vlaneseq
    %v2172 = vshrl.u32 %v2171, 7
    %v2173 = vsub.s32 1, %v2172
    %v2174 = vrot.slane %v2163, %v2173
    %2176 = vbcast.lane.b32.xlu0 %v2174, 256
    %v2177 = vpop.permute.xlu0 %2176
    %v2178 = vmul.f32 %v62, %v2170
    %v2179 = vmul.f32 %v63, %v2177
    %v2180 = vsel %vm76, %v2178, 0.0
    %v2181 = vrot.slane %v2180, 4
    %v2182 = vadd.f32 %v2180, %v2181
    %v2183 = vrot.slane %v2182, 2
    %v2184 = vadd.f32 %v2182, %v2183
    %v2185 = vrot.slane %v2184, 1
    %v2186 = vadd.f32 %v2184, %v2185
    %v2187 = vsel %vm76, %v2179, 0.0
    %v2188 = vrot.slane %v2187, 4
    %v2189 = vadd.f32 %v2187, %v2188
    %v2190 = vrot.slane %v2189, 2
    %v2191 = vadd.f32 %v2189, %v2190
    %v2192 = vrot.slane %v2191, 1
    %v2193 = vadd.f32 %v2191, %v2192
    %v2196 = vsel %vm559, %v2193, %v2186
    %2198 = vrot.lane.b32.xlu0 %v1907, 32
    %v2199 = vpop.permute.xlu0 %2198
    %2201 = vrot.lane.b32.xlu0 %v1683, 32
    %v2202 = vpop.permute.xlu0 %2201
    %v2204 = vsel %vm76, %v2196, %v2199
    %v2205 = vsel %vm652, %v2204, %v2202
    %v2207 = vsel %vm955, %v2205, 0
    %2209 = vmatprep.subr.mxu0 0.0
    %2210 = vmatpush1.msra.mxu0 %v281
    %2211 = vmatprep.subr.mxu0 0.0
    %2212 = vmatpush1.msra.mxu0 %v282
    %2213 = vmatprep.subr.mxu0 0.0
    %2214 = vmatpush1.msra.mxu0 %v283
    %2215 = vmatprep.subr.mxu0 0.0
    %2216 = vmatpush1.msra.mxu0 %v284
    %2217 = vmatprep.subr.mxu0 0.0
    %2218 = vmatpush1.msra.mxu0 %v285
    %2219 = vmatprep.subr.mxu0 0.0
    %2220 = vmatpush1.msra.mxu0 %v286
    %2221 = vmatprep.subr.mxu0 0.0
    %2222 = vmatpush1.msra.mxu0 %v287
    %2223 = vmatprep.subr.mxu0 0.0
    %2224 = vmatpush1.msra.mxu0 %v288
    %2225 = vmatprep.subr.mxu0 0.0
    %2226 = vmatpush1.msra.mxu0 %v289
    %2227 = vmatprep.subr.mxu0 0.0
    %2228 = vmatpush1.msra.mxu0 %v290
    %2229 = vmatprep.subr.mxu0 0.0
    %2230 = vmatpush1.msra.mxu0 %v291
    %2231 = vmatprep.subr.mxu0 0.0
    %2232 = vmatpush1.msra.mxu0 %v292
    %2233 = vmatprep.subr.mxu0 0.0
    %2234 = vmatpush1.msra.mxu0 0.0
    %2235 = vmatprep.subr.mxu0 0.0
    %2236 = vmatpush1.msra.mxu0 0.0
    %2237 = vmatprep.subr.mxu0 0.0
    %2238 = vmatpush1.msra.mxu0 0.0
    %2239 = vmatprep.subr.mxu0 0.0
    %2240 = vmatpush1.msra.mxu0 0.0
    %2241 = vmatprep.subr.mxu0 0.0
    %2242 = vmatpush1.msra.mxu0 0.0
    %2243 = vmatprep.subr.mxu0 0.0
    %2244 = vmatpush1.msra.mxu0 0.0
    %2245 = vmatprep.subr.mxu0 0.0
    %2246 = vmatpush1.msra.mxu0 0.0
    %2247 = vmatprep.subr.mxu0 0.0
    %2248 = vmatpush1.msra.mxu0 0.0
    %2249 = vmatprep.subr.mxu0 0.0
    %2250 = vmatpush1.msra.mxu0 0.0
    %2251 = vmatprep.subr.mxu0 0.0
    %2252 = vmatpush1.msra.mxu0 0.0
    %2253 = vmatprep.subr.mxu0 0.0
    %2254 = vmatpush1.msra.mxu0 0.0
    %2255 = vmatprep.subr.mxu0 0.0
    %2256 = vmatpush1.msra.mxu0 0.0
    %2257 = vmatprep.subr.mxu0 0.0
    %2258 = vmatpush1.msra.mxu0 0.0
    %2259 = vmatprep.subr.mxu0 0.0
    %2260 = vmatpush1.msra.mxu0 0.0
    %2261 = vmatprep.subr.mxu0 0.0
    %2262 = vmatpush1.msra.mxu0 0.0
    %2263 = vmatprep.subr.mxu0 0.0
    %2264 = vmatpush1.msra.mxu0 0.0
    %2265 = vmatprep.subr.mxu0 0.0
    %2266 = vmatpush1.msra.mxu0 0.0
    %2267 = vmatprep.subr.mxu0 0.0
    %2268 = vmatpush1.msra.mxu0 0.0
    %2269 = vmatprep.subr.mxu0 0.0
    %2270 = vmatpush1.msra.mxu0 0.0
    %2271 = vmatprep.subr.mxu0 0.0
    %2272 = vmatpush1.msra.mxu0 0.0
    %2273 = vmatprep.mubr.f32.mxu0 0.0
    %2274 = vmatmul.mubr.f32.gmra.mrb[0].mxu0 %v2207
    %v2275 = vpop.f32.mrb[0].mxu0
    %v2276 = vadd.f32 %v298, %v2275
    %v2277 = vpop.f32.mrb[0].mxu0
    %2278 = vdwg.mxu0
    %s2279 = scalar_lea.vmem %s17, 4
    %2280 = vst.msk [vmem:[%s2279] sm:$0x3] %vm562, %v2111
    %s2281 = scalar_lea.vmem %s18, 4
    %2282 = vst.msk [vmem:[%s2281] sm:$0x3] %vm562, %v1822
    %s2283 = scalar_lea.vmem [#allocation2], 4
    %2284 = vst.msk [vmem:[%s2283] sm:$0x3] %vm1031, %v2276
    %vm2286 = vcmask 254976
    %2287 = vst.msk [vmem:[#allocation4] sm:$0x3] %vm2286, %v1686
    // Predicated region
    $region70: #{decoder_forward.1} parent=1 // pred_check
      _
    $region71: #{decoder_forward.1} parent=1 // pred_check_branch
      %2289 = sbr.rel (0) target = $region73
    $region72: #{decoder_forward.1} parent=1 // pred_region
      _
    $region73: #{decoder_forward.1} parent=1 // pred_fallthru
      _
    // Predicated region
    $region74: #{decoder_forward.1} parent=1 // pred_check
      _
    $region75: #{decoder_forward.1} parent=1 // pred_check_branch
      %2291 = sbr.rel (0) target = $region77
    $region76: #{decoder_forward.1} parent=1 // pred_region
      _
    $region77: #{decoder_forward.1} parent=1 // pred_fallthru
      _
    // Predicated region
    $region78: #{decoder_forward.1} parent=1 // pred_check
      _
    $region79: #{decoder_forward.1} parent=1 // pred_check_branch
      %2293 = sbr.rel (0) target = $region81
    $region80: #{decoder_forward.1} parent=1 // pred_region
      %s2295 = ssub.s32 96, 96
      %2296 = vsyncadd [#allocation3], %s2295
      %s2297 = sshll.u32 [#allocation2], 4
      %s2298 = int_to_ptr.vmem [resolvable:$true] %s2297
      %2303 = dma.vmem_to_hbm [thread:$0]  %s2298, 96, %s19, [#allocation3], 32, 32, 2
    $region81: #{decoder_forward.1} parent=1 // pred_fallthru
      _
    // Predicated region
    $region82: #{decoder_forward.1} parent=1 // pred_check
      _
    $region83: #{decoder_forward.1} parent=1 // pred_check_branch
      %2305 = sbr.rel (0) target = $region85
    $region84: #{decoder_forward.1} parent=1 // pred_region
      %s2307 = ssub.s32 32, 32
      %2308 = vsyncadd [#allocation5], %s2307
      %s2310 = sshll.u32 [#allocation4], 4
      %s2311 = int_to_ptr.vmem [resolvable:$true] %s2310
      %2313 = dma.vmem_to_hbm [thread:$0]  %s2311, 32, %s20, [#allocation5]
    $region85: #{decoder_forward.1} parent=1 // pred_fallthru
      _
    // Predicated region
    $region86: #{decoder_forward.1} parent=1 // pred_check
      _
    $region87: #{decoder_forward.1} parent=1 // pred_check_branch
      %2315 = sbr.rel (0) target = $region89
    $region88: #{decoder_forward.1} parent=1 // pred_region
      _
    $region89: #{decoder_forward.1} parent=1 // pred_fallthru
      _
    // Predicated region
    $region90: #{decoder_forward.1} parent=1 // pred_check
      _
    $region91: #{decoder_forward.1} parent=1 // pred_check_branch
      %2317 = sbr.rel (0) target = $region93
    $region92: #{decoder_forward.1} parent=1 // pred_region
      _
    $region93: #{decoder_forward.1} parent=1 // pred_fallthru
      _
    // Predicated region
    $region94: #{decoder_forward.1} parent=1 // pred_check
      _
    $region95: #{decoder_forward.1} parent=1 // pred_check_branch
      %2319 = sbr.rel (0) target = $region97
    $region96: #{decoder_forward.1} parent=1 // pred_region
      %2320 = dma.done [#allocation3], 96
    $region97: #{decoder_forward.1} parent=1 // pred_fallthru
      _
    // Predicated region
    $region98: #{decoder_forward.1} parent=1 // pred_check
      _
    $region99: #{decoder_forward.1} parent=1 // pred_check_branch
      %2322 = sbr.rel (0) target = $region101
    $region100: #{decoder_forward.1} parent=1 // pred_region
      %2323 = dma.done [#allocation5], 32
    $region101: #{decoder_forward.1} parent=1 // pred_fallthru
      _
    %2324 = vsyncpa [#allocation3], 1
    %2325 = vsyncpa [#allocation5], 1

</llo_original>
